<compile_context>
chip_gen: v6e
topology: v6e:2x2x1
jax: 0.10.0
libtpu: 0.0.40
codegen_flags: <defaults>
</compile_context>

<pallas_src>
import numpy as np
import jax
import jax.numpy as jnp
from jax import lax
from jax.experimental import pallas as pl
from jax.experimental.pallas import tpu as pltpu

H = W = 7
HW = H * W
_PAD = 8                                                        # max |tap lane shift| = 7 + 1
TAPS = tuple((a, b) for a in (-1, 0, 1) for b in (-1, 0, 1))    # (row, col) offsets of the 3x3 conv


def cdblock_kernel(x_ref, w1t_ref, w2_ref, fcw_avg_ref, fcw_max_ref, fcb_ref,
                   wtap_ref, out_ref):
    x = x_ref[...]                                    # (Nb, C, HW) f32

    # ---------------- ChannelAttention: sigmoid(fc(avgpool) + fc(maxpool)) ----------------
    avg_c = jnp.mean(x, axis=2, keepdims=True)        # (Nb, C, 1)
    max_c = jnp.max(x, axis=2, keepdims=True)         # (Nb, C, 1)
    w1t = w1t_ref[...]                                # (1, C, Cr)  == Conv2d(C,Cr,1).weight^T
    w2 = w2_ref[...]                                  # (1, C, Cr)  == Conv2d(Cr,C,1).weight
    # fc1 (+ReLU) per branch as broadcast-mul + channel (sublane) reduction -- no per-sample MXU ops.
    h_avg = jnp.maximum(jnp.sum(avg_c * w1t, axis=1, keepdims=True), 0.0)   # (Nb, 1, Cr)
    h_max = jnp.maximum(jnp.sum(max_c * w1t, axis=1, keepdims=True), 0.0)   # (Nb, 1, Cr)
    # fc2 is linear with no bias -> fc2(a) + fc2(b) == fc2(a + b): one fused second layer.
    ca = jax.nn.sigmoid(jnp.sum((h_avg + h_max) * w2, axis=2, keepdims=True))  # (Nb, C, 1)

    # ---------------- SpatialAttention ----------------
    avg_s = jnp.mean(x, axis=1, keepdims=True)        # (Nb, 1, HW)
    max_s = jnp.max(x, axis=1, keepdims=True)         # (Nb, 1, HW)

    # p = sigmoid(Linear(98 -> 1)(cat([avg, max]))) : lane-dense row weights + lane reduction.
    p = jax.nn.sigmoid(
        jnp.sum(avg_s * fcw_avg_ref[...], axis=2, keepdims=True)
        + jnp.sum(max_s * fcw_max_ref[...], axis=2, keepdims=True)
        + fcb_ref[...])                               # (Nb, 1, 1)

    # 3x3 SAME conv over the 2-channel (avg, max) map: 9 static lane shifts on the zero-padded
    # flattened map; the row-wrap is handled by the padding and the column-validity mask is
    # pre-folded into the tap weights (wtap), so no in-kernel masking is needed.
    sm = jnp.concatenate([avg_s, max_s], axis=1)      # (Nb, 2, HW)
    zpad = jnp.zeros((sm.shape[0], 2, _PAD), sm.dtype)
    smp = jnp.concatenate([zpad, sm, zpad], axis=2)   # (Nb, 2, HW + 2*_PAD)
    wtap = wtap_ref[...]                              # (1, 2, 9*HW)
    acc = jnp.zeros_like(sm)
    for k, (a, b) in enumerate(TAPS):
        delta = a * W + b
        shifted = smp[:, :, _PAD + delta:_PAD + delta + HW]         # (Nb, 2, HW)
        acc = acc + shifted * wtap[:, :, k * HW:(k + 1) * HW]
    conv_out = acc[:, 0:1, :] + acc[:, 1:2, :]        # (Nb, 1, HW)  sum over the 2 conv input channels
    sa = jax.nn.sigmoid(conv_out) * p                 # (Nb, 1, HW)

    # ---------------- CBAM + residual + ReLU (single full-block store) ----------------
    out_ref[...] = jnp.maximum(sa * x * ca + x, 0.0)


def _conv_tap_weights(conv_w):
    """conv_w: (1, 2, 3, 3) = Conv2d(2, 1, 3, padding=1, bias=False).weight.
    Returns (1, 2, 9*HW) per-tap lane weights with the column-wrap mask folded in."""
    cw = np.asarray(conv_w, dtype=np.float32)
    wt = np.zeros((2, len(TAPS) * HW), dtype=np.float32)
    for k, (a, b) in enumerate(TAPS):
        for c in range(2):
            for s in range(HW):
                if 0 <= (s % W) + b < W:              # neighbour column stays inside the 7-wide row
                    wt[c, k * HW + s] = cw[0, c, a + 1, b + 1]
    return jnp.asarray(wt.reshape(1, 2, len(TAPS) * HW))


def _pick_batch_tile(n, c, vmem_budget_bytes=8 << 20):
    # 2 (in + out) x 2 (double buffering) x Nb x C x HW x 4B  <= budget   (safe on v5e/v6e/v7x)
    nb = vmem_budget_bytes // (16 * c * HW)
    return int(max(1, min(n, nb, 128)))


def cdblock_forward(x_nchw, params, nb=None):
    """x_nchw: (N, C, 7, 7) float32 -> relu(sa_map * x * ca_map + x)."""
    N, C, h, w = x_nchw.shape
    assert (h, w) == (H, W), "SpatialAttention hard-codes a 7x7 spatial map"
    Cr = params["ca_w1"].shape[0]

    if nb is None:
        nb = _pick_batch_tile(N, C)
    nb = int(max(1, min(nb, N)))
    n_pad = pl.cdiv(N, nb) * nb

    x_flat = x_nchw.reshape(N, C, HW)
    if n_pad != N:
        x_flat = jnp.pad(x_flat, ((0, n_pad - N), (0, 0), (0, 0)))

    w1t = jnp.asarray(params["ca_w1"]).T[None]                  # (1, C, Cr)
    w2 = jnp.asarray(params["ca_w2"])[None]                     # (1, C, Cr)
    fcw = jnp.asarray(params["sa_fc_w"], jnp.float32)           # (1, 2*HW) torch Linear layout
    fcw_avg = fcw[:, :HW].reshape(1, 1, HW)
    fcw_max = fcw[:, HW:].reshape(1, 1, HW)
    fcb = jnp.asarray(params["sa_fc_b"], jnp.float32).reshape(1, 1, 1)
    wtap = _conv_tap_weights(params["sa_conv_w"])               # (1, 2, 9*HW)

    full = lambda shp: pl.BlockSpec(shp, lambda i: (0,) * len(shp))

    out = pl.pallas_call(
        cdblock_kernel,
        out_shape=jax.ShapeDtypeStruct((n_pad, C, HW), jnp.float32),
        grid=(n_pad // nb,),
        in_specs=[
            pl.BlockSpec((nb, C, HW), lambda i: (i, 0, 0)),     # x: Nb samples per grid step
            full((1, C, Cr)),                                   # channel-attention fc1 weight (transposed)
            full((1, C, Cr)),                                   # channel-attention fc2 weight
            full((1, 1, HW)),                                   # spatial fc weight (avg half)
            full((1, 1, HW)),                                   # spatial fc weight (max half)
            full((1, 1, 1)),                                    # spatial fc bias
            full((1, 2, len(TAPS) * HW)),                       # masked 3x3 conv tap weights
        ],
        out_specs=pl.BlockSpec((nb, C, HW), lambda i: (i, 0, 0)),
        compiler_params=pltpu.CompilerParams(dimension_semantics=("parallel",)),
    )(x_flat, w1t, w2, fcw_avg, fcw_max, fcb, wtap)

    return out[:N].reshape(N, C, H, W)


def cdblock_reference(x, params):
    """Pure-JAX reference mirroring the PyTorch forward."""
    w1, w2 = params["ca_w1"], params["ca_w2"]
    avg = x.mean(axis=(2, 3))
    mx = x.max(axis=(2, 3))
    fc = lambda v: jnp.maximum(v @ w1.T, 0.0) @ w2.T
    ca = jax.nn.sigmoid(fc(avg) + fc(mx))[:, :, None, None]

    avg_s = x.mean(axis=1, keepdims=True)
    max_s = x.max(axis=1, keepdims=True)
    xc = jnp.concatenate([avg_s, max_s], axis=1)                # (N, 2, 7, 7)
    flat = xc.reshape(x.shape[0], -1)
    p = jax.nn.sigmoid(flat @ params["sa_fc_w"].T + params["sa_fc_b"])[:, :, None, None]
    conv = lax.conv_general_dilated(xc, params["sa_conv_w"], (1, 1), "SAME",
                                    dimension_numbers=("NCHW", "OIHW", "NCHW"))
    sa = jax.nn.sigmoid(conv) * p
    return jnp.maximum(sa * x * ca + x, 0.0)


if __name__ == "__main__":
    N, C = 10, 32                      # C divisible by 16 -> hidden channels = 2
    Cr = C // 16

    key = jax.random.PRNGKey(0)
    k_x, k1, k2, k3, k4, k5 = jax.random.split(key, 6)

    x = jax.random.normal(k_x, (N, C, H, W), dtype=jnp.float32)

    params = {
        "ca_w1": 0.1 * jax.random.normal(k1, (Cr, C), dtype=jnp.float32),        # Conv2d(C, C//16, 1).weight
        "ca_w2": 0.1 * jax.random.normal(k2, (C, Cr), dtype=jnp.float32),        # Conv2d(C//16, C, 1).weight
        "sa_fc_w": 0.1 * jax.random.normal(k3, (1, 2 * HW), dtype=jnp.float32),  # Linear(98, 1).weight
        "sa_fc_b": 0.1 * jax.random.normal(k4, (1,), dtype=jnp.float32),         # Linear(98, 1).bias
        "sa_conv_w": 0.1 * jax.random.normal(k5, (1, 2, 3, 3), dtype=jnp.float32),  # Conv2d(2,1,3).weight
    }

    ref = cdblock_reference(x, params)

    # Default batched tile (whole batch in a single grid step here).
    out = jax.block_until_ready(cdblock_forward(x, params))
    np.testing.assert_allclose(np.asarray(out), np.asarray(ref), rtol=1e-4, atol=1e-4)

    # Exercise the multi-step grid + batch-padding path as well.
    out2 = jax.block_until_ready(cdblock_forward(x, params, nb=4))
    np.testing.assert_allclose(np.asarray(out2), np.asarray(ref), rtol=1e-4, atol=1e-4)

    print("KERNEL_OK")
</pallas_src>

<mosaic_0001>
module attributes {stable_mosaic.version = 11 : i64} {
  func.func @cdblock_kernel(%arg0: i32, %arg1: memref<10x32x49xf32, #tpu.memory_space<vmem>>, %arg2: memref<1x32x2xf32, #tpu.memory_space<vmem>>, %arg3: memref<1x32x2xf32, #tpu.memory_space<vmem>>, %arg4: memref<1x1x49xf32, #tpu.memory_space<vmem>>, %arg5: memref<1x1x49xf32, #tpu.memory_space<vmem>>, %arg6: memref<1x1x1xf32, #tpu.memory_space<vmem>>, %arg7: memref<1x2x441xf32, #tpu.memory_space<vmem>>, %arg8: memref<10x32x49xf32, #tpu.memory_space<vmem>>) attributes {dimension_semantics = [#tpu.dimension_semantics<parallel>], iteration_bounds = array<i64: 1>, scalar_prefetch = 0 : i64, scratch_operands = 0 : i64, tpu.core_type = #tpu.core_type<tc>, window_params = [{transform_indices = @transform_0, window_bounds = array<i64: 10, 32, 49>}, {pipeline_mode = #tpu.pipeline_mode<synchronous>, transform_indices = @transform_1, window_bounds = array<i64: 1, 32, 2>}, {pipeline_mode = #tpu.pipeline_mode<synchronous>, transform_indices = @transform_2, window_bounds = array<i64: 1, 32, 2>}, {pipeline_mode = #tpu.pipeline_mode<synchronous>, transform_indices = @transform_3, window_bounds = array<i64: 1, 1, 49>}, {pipeline_mode = #tpu.pipeline_mode<synchronous>, transform_indices = @transform_4, window_bounds = array<i64: 1, 1, 49>}, {pipeline_mode = #tpu.pipeline_mode<synchronous>, transform_indices = @transform_5, window_bounds = array<i64: 1, 1, 1>}, {pipeline_mode = #tpu.pipeline_mode<synchronous>, transform_indices = @transform_6, window_bounds = array<i64: 1, 2, 441>}, {transform_indices = @transform_7, window_bounds = array<i64: 10, 32, 49>}]} {
    %c0 = arith.constant 0 : index
    %c0_0 = arith.constant 0 : index
    %c0_1 = arith.constant 0 : index
    %0 = vector.load %arg1[%c0, %c0_0, %c0_1] : memref<10x32x49xf32, #tpu.memory_space<vmem>>, vector<10x32x49xf32>
    %cst = arith.constant dense<0.000000e+00> : vector<10x32xf32>
    %1 = vector.multi_reduction <add>, %0, %cst [2] : vector<10x32x49xf32> to vector<10x32xf32>
    %2 = vector.shape_cast %1 : vector<10x32xf32> to vector<10x32x1xf32>
    %cst_2 = arith.constant 4.900000e+01 : f32
    %3 = vector.broadcast %cst_2 : f32 to vector<10x32x1xf32>
    %4 = arith.divf %2, %3 : vector<10x32x1xf32>
    %cst_3 = arith.constant dense<0xFF800000> : vector<10x32xf32>
    %5 = vector.multi_reduction <maximumf>, %0, %cst_3 [2] : vector<10x32x49xf32> to vector<10x32xf32>
    %6 = vector.shape_cast %5 : vector<10x32xf32> to vector<10x32x1xf32>
    %c0_4 = arith.constant 0 : index
    %c0_5 = arith.constant 0 : index
    %c0_6 = arith.constant 0 : index
    %7 = vector.load %arg2[%c0_4, %c0_5, %c0_6] : memref<1x32x2xf32, #tpu.memory_space<vmem>>, vector<1x32x2xf32>
    %c0_7 = arith.constant 0 : index
    %c0_8 = arith.constant 0 : index
    %c0_9 = arith.constant 0 : index
    %8 = vector.load %arg3[%c0_7, %c0_8, %c0_9] : memref<1x32x2xf32, #tpu.memory_space<vmem>>, vector<1x32x2xf32>
    %9 = vector.broadcast %4 : vector<10x32x1xf32> to vector<10x32x2xf32>
    %10 = vector.broadcast %7 : vector<1x32x2xf32> to vector<10x32x2xf32>
    %11 = arith.mulf %9, %10 : vector<10x32x2xf32>
    %cst_10 = arith.constant dense<0.000000e+00> : vector<10x2xf32>
    %12 = vector.multi_reduction <add>, %11, %cst_10 [1] : vector<10x32x2xf32> to vector<10x2xf32>
    %13 = vector.shape_cast %12 : vector<10x2xf32> to vector<10x1x2xf32>
    %cst_11 = arith.constant 0.000000e+00 : f32
    %14 = vector.broadcast %cst_11 : f32 to vector<10x1x2xf32>
    %15 = arith.maximumf %13, %14 : vector<10x1x2xf32>
    %16 = vector.broadcast %6 : vector<10x32x1xf32> to vector<10x32x2xf32>
    %17 = vector.broadcast %7 : vector<1x32x2xf32> to vector<10x32x2xf32>
    %18 = arith.mulf %16, %17 : vector<10x32x2xf32>
    %cst_12 = arith.constant dense<0.000000e+00> : vector<10x2xf32>
    %19 = vector.multi_reduction <add>, %18, %cst_12 [1] : vector<10x32x2xf32> to vector<10x2xf32>
    %20 = vector.shape_cast %19 : vector<10x2xf32> to vector<10x1x2xf32>
    %cst_13 = arith.constant 0.000000e+00 : f32
    %21 = vector.broadcast %cst_13 : f32 to vector<10x1x2xf32>
    %22 = arith.maximumf %20, %21 : vector<10x1x2xf32>
    %23 = arith.addf %15, %22 : vector<10x1x2xf32>
    %24 = vector.broadcast %23 : vector<10x1x2xf32> to vector<10x32x2xf32>
    %25 = vector.broadcast %8 : vector<1x32x2xf32> to vector<10x32x2xf32>
    %26 = arith.mulf %24, %25 : vector<10x32x2xf32>
    %cst_14 = arith.constant dense<0.000000e+00> : vector<10x32xf32>
    %27 = vector.multi_reduction <add>, %26, %cst_14 [2] : vector<10x32x2xf32> to vector<10x32xf32>
    %28 = vector.shape_cast %27 : vector<10x32xf32> to vector<10x32x1xf32>
    %29 = arith.negf %28 : vector<10x32x1xf32>
    %30 = math.exp %29 : vector<10x32x1xf32>
    %cst_15 = arith.constant 1.000000e+00 : f32
    %31 = vector.broadcast %cst_15 : f32 to vector<10x32x1xf32>
    %32 = arith.addf %31, %30 : vector<10x32x1xf32>
    %33 = arith.divf %31, %32 : vector<10x32x1xf32>
    %cst_16 = arith.constant dense<0.000000e+00> : vector<10x49xf32>
    %34 = vector.multi_reduction <add>, %0, %cst_16 [1] : vector<10x32x49xf32> to vector<10x49xf32>
    %35 = vector.shape_cast %34 : vector<10x49xf32> to vector<10x1x49xf32>
    %cst_17 = arith.constant 3.200000e+01 : f32
    %36 = vector.broadcast %cst_17 : f32 to vector<10x1x49xf32>
    %37 = arith.divf %35, %36 : vector<10x1x49xf32>
    %cst_18 = arith.constant dense<0xFF800000> : vector<10x49xf32>
    %38 = vector.multi_reduction <maximumf>, %0, %cst_18 [1] : vector<10x32x49xf32> to vector<10x49xf32>
    %39 = vector.shape_cast %38 : vector<10x49xf32> to vector<10x1x49xf32>
    %c0_19 = arith.constant 0 : index
    %c0_20 = arith.constant 0 : index
    %c0_21 = arith.constant 0 : index
    %40 = vector.load %arg4[%c0_19, %c0_20, %c0_21] : memref<1x1x49xf32, #tpu.memory_space<vmem>>, vector<1x1x49xf32>
    %41 = vector.broadcast %40 : vector<1x1x49xf32> to vector<10x1x49xf32>
    %42 = arith.mulf %37, %41 : vector<10x1x49xf32>
    %cst_22 = arith.constant dense<0.000000e+00> : vector<10x1xf32>
    %43 = vector.multi_reduction <add>, %42, %cst_22 [2] : vector<10x1x49xf32> to vector<10x1xf32>
    %44 = vector.shape_cast %43 : vector<10x1xf32> to vector<10x1x1xf32>
    %c0_23 = arith.constant 0 : index
    %c0_24 = arith.constant 0 : index
    %c0_25 = arith.constant 0 : index
    %45 = vector.load %arg5[%c0_23, %c0_24, %c0_25] : memref<1x1x49xf32, #tpu.memory_space<vmem>>, vector<1x1x49xf32>
    %46 = vector.broadcast %45 : vector<1x1x49xf32> to vector<10x1x49xf32>
    %47 = arith.mulf %39, %46 : vector<10x1x49xf32>
    %cst_26 = arith.constant dense<0.000000e+00> : vector<10x1xf32>
    %48 = vector.multi_reduction <add>, %47, %cst_26 [2] : vector<10x1x49xf32> to vector<10x1xf32>
    %49 = vector.shape_cast %48 : vector<10x1xf32> to vector<10x1x1xf32>
    %50 = arith.addf %44, %49 : vector<10x1x1xf32>
    %c0_27 = arith.constant 0 : index
    %c0_28 = arith.constant 0 : index
    %c0_29 = arith.constant 0 : index
    %51 = vector.load %arg6[%c0_27, %c0_28, %c0_29] : memref<1x1x1xf32, #tpu.memory_space<vmem>>, vector<1x1x1xf32>
    %52 = vector.broadcast %51 : vector<1x1x1xf32> to vector<10x1x1xf32>
    %53 = arith.addf %50, %52 : vector<10x1x1xf32>
    %54 = arith.negf %53 : vector<10x1x1xf32>
    %55 = math.exp %54 : vector<10x1x1xf32>
    %cst_30 = arith.constant 1.000000e+00 : f32
    %56 = vector.broadcast %cst_30 : f32 to vector<10x1x1xf32>
    %57 = arith.addf %56, %55 : vector<10x1x1xf32>
    %58 = arith.divf %56, %57 : vector<10x1x1xf32>
    %59 = tpu.concatenate %37, %39 in 1 : vector<10x1x49xf32>, vector<10x1x49xf32> -> vector<10x2x49xf32>
    %cst_31 = arith.constant 0.000000e+00 : f32
    %60 = vector.broadcast %cst_31 : f32 to vector<10x2x8xf32>
    %61 = tpu.concatenate %60, %59, %60 in 2 : vector<10x2x8xf32>, vector<10x2x49xf32>, vector<10x2x8xf32> -> vector<10x2x65xf32>
    %c0_32 = arith.constant 0 : index
    %c0_33 = arith.constant 0 : index
    %c0_34 = arith.constant 0 : index
    %62 = vector.load %arg7[%c0_32, %c0_33, %c0_34] : memref<1x2x441xf32, #tpu.memory_space<vmem>>, vector<1x2x441xf32>
    %cst_35 = arith.constant 0.000000e+00 : f32
    %63 = vector.broadcast %cst_35 : f32 to vector<10x2x49xf32>
    %64 = vector.extract_strided_slice %61 {offsets = [0, 0, 0], sizes = [10, 2, 49], strides = [1, 1, 1]} : vector<10x2x65xf32> to vector<10x2x49xf32>
    %65 = vector.extract_strided_slice %62 {offsets = [0, 0, 0], sizes = [1, 2, 49], strides = [1, 1, 1]} : vector<1x2x441xf32> to vector<1x2x49xf32>
    %66 = vector.broadcast %65 : vector<1x2x49xf32> to vector<10x2x49xf32>
    %67 = arith.mulf %64, %66 : vector<10x2x49xf32>
    %68 = arith.addf %63, %67 : vector<10x2x49xf32>
    %69 = vector.extract_strided_slice %61 {offsets = [0, 0, 1], sizes = [10, 2, 49], strides = [1, 1, 1]} : vector<10x2x65xf32> to vector<10x2x49xf32>
    %70 = vector.extract_strided_slice %62 {offsets = [0, 0, 49], sizes = [1, 2, 49], strides = [1, 1, 1]} : vector<1x2x441xf32> to vector<1x2x49xf32>
    %71 = vector.broadcast %70 : vector<1x2x49xf32> to vector<10x2x49xf32>
    %72 = arith.mulf %69, %71 : vector<10x2x49xf32>
    %73 = arith.addf %68, %72 : vector<10x2x49xf32>
    %74 = vector.extract_strided_slice %61 {offsets = [0, 0, 2], sizes = [10, 2, 49], strides = [1, 1, 1]} : vector<10x2x65xf32> to vector<10x2x49xf32>
    %75 = vector.extract_strided_slice %62 {offsets = [0, 0, 98], sizes = [1, 2, 49], strides = [1, 1, 1]} : vector<1x2x441xf32> to vector<1x2x49xf32>
    %76 = vector.broadcast %75 : vector<1x2x49xf32> to vector<10x2x49xf32>
    %77 = arith.mulf %74, %76 : vector<10x2x49xf32>
    %78 = arith.addf %73, %77 : vector<10x2x49xf32>
    %79 = vector.extract_strided_slice %61 {offsets = [0, 0, 7], sizes = [10, 2, 49], strides = [1, 1, 1]} : vector<10x2x65xf32> to vector<10x2x49xf32>
    %80 = vector.extract_strided_slice %62 {offsets = [0, 0, 147], sizes = [1, 2, 49], strides = [1, 1, 1]} : vector<1x2x441xf32> to vector<1x2x49xf32>
    %81 = vector.broadcast %80 : vector<1x2x49xf32> to vector<10x2x49xf32>
    %82 = arith.mulf %79, %81 : vector<10x2x49xf32>
    %83 = arith.addf %78, %82 : vector<10x2x49xf32>
    %84 = vector.extract_strided_slice %61 {offsets = [0, 0, 8], sizes = [10, 2, 49], strides = [1, 1, 1]} : vector<10x2x65xf32> to vector<10x2x49xf32>
    %85 = vector.extract_strided_slice %62 {offsets = [0, 0, 196], sizes = [1, 2, 49], strides = [1, 1, 1]} : vector<1x2x441xf32> to vector<1x2x49xf32>
    %86 = vector.broadcast %85 : vector<1x2x49xf32> to vector<10x2x49xf32>
    %87 = arith.mulf %84, %86 : vector<10x2x49xf32>
    %88 = arith.addf %83, %87 : vector<10x2x49xf32>
    %89 = vector.extract_strided_slice %61 {offsets = [0, 0, 9], sizes = [10, 2, 49], strides = [1, 1, 1]} : vector<10x2x65xf32> to vector<10x2x49xf32>
    %90 = vector.extract_strided_slice %62 {offsets = [0, 0, 245], sizes = [1, 2, 49], strides = [1, 1, 1]} : vector<1x2x441xf32> to vector<1x2x49xf32>
    %91 = vector.broadcast %90 : vector<1x2x49xf32> to vector<10x2x49xf32>
    %92 = arith.mulf %89, %91 : vector<10x2x49xf32>
    %93 = arith.addf %88, %92 : vector<10x2x49xf32>
    %94 = vector.extract_strided_slice %61 {offsets = [0, 0, 14], sizes = [10, 2, 49], strides = [1, 1, 1]} : vector<10x2x65xf32> to vector<10x2x49xf32>
    %95 = vector.extract_strided_slice %62 {offsets = [0, 0, 294], sizes = [1, 2, 49], strides = [1, 1, 1]} : vector<1x2x441xf32> to vector<1x2x49xf32>
    %96 = vector.broadcast %95 : vector<1x2x49xf32> to vector<10x2x49xf32>
    %97 = arith.mulf %94, %96 : vector<10x2x49xf32>
    %98 = arith.addf %93, %97 : vector<10x2x49xf32>
    %99 = vector.extract_strided_slice %61 {offsets = [0, 0, 15], sizes = [10, 2, 49], strides = [1, 1, 1]} : vector<10x2x65xf32> to vector<10x2x49xf32>
    %100 = vector.extract_strided_slice %62 {offsets = [0, 0, 343], sizes = [1, 2, 49], strides = [1, 1, 1]} : vector<1x2x441xf32> to vector<1x2x49xf32>
    %101 = vector.broadcast %100 : vector<1x2x49xf32> to vector<10x2x49xf32>
    %102 = arith.mulf %99, %101 : vector<10x2x49xf32>
    %103 = arith.addf %98, %102 : vector<10x2x49xf32>
    %104 = vector.extract_strided_slice %61 {offsets = [0, 0, 16], sizes = [10, 2, 49], strides = [1, 1, 1]} : vector<10x2x65xf32> to vector<10x2x49xf32>
    %105 = vector.extract_strided_slice %62 {offsets = [0, 0, 392], sizes = [1, 2, 49], strides = [1, 1, 1]} : vector<1x2x441xf32> to vector<1x2x49xf32>
    %106 = vector.broadcast %105 : vector<1x2x49xf32> to vector<10x2x49xf32>
    %107 = arith.mulf %104, %106 : vector<10x2x49xf32>
    %108 = arith.addf %103, %107 : vector<10x2x49xf32>
    %109 = vector.extract_strided_slice %108 {offsets = [0, 0, 0], sizes = [10, 1, 49], strides = [1, 1, 1]} : vector<10x2x49xf32> to vector<10x1x49xf32>
    %110 = vector.extract_strided_slice %108 {offsets = [0, 1, 0], sizes = [10, 1, 49], strides = [1, 1, 1]} : vector<10x2x49xf32> to vector<10x1x49xf32>
    %111 = arith.addf %109, %110 : vector<10x1x49xf32>
    %112 = arith.negf %111 : vector<10x1x49xf32>
    %113 = math.exp %112 : vector<10x1x49xf32>
    %cst_36 = arith.constant 1.000000e+00 : f32
    %114 = vector.broadcast %cst_36 : f32 to vector<10x1x49xf32>
    %115 = arith.addf %114, %113 : vector<10x1x49xf32>
    %116 = arith.divf %114, %115 : vector<10x1x49xf32>
    %117 = vector.broadcast %58 : vector<10x1x1xf32> to vector<10x1x49xf32>
    %118 = arith.mulf %116, %117 : vector<10x1x49xf32>
    %119 = vector.broadcast %118 : vector<10x1x49xf32> to vector<10x32x49xf32>
    %120 = arith.mulf %119, %0 : vector<10x32x49xf32>
    %121 = vector.broadcast %33 : vector<10x32x1xf32> to vector<10x32x49xf32>
    %122 = arith.mulf %120, %121 : vector<10x32x49xf32>
    %123 = arith.addf %122, %0 : vector<10x32x49xf32>
    %cst_37 = arith.constant 0.000000e+00 : f32
    %124 = vector.broadcast %cst_37 : f32 to vector<10x32x49xf32>
    %125 = arith.maximumf %123, %124 : vector<10x32x49xf32>
    %c0_38 = arith.constant 0 : index
    %c0_39 = arith.constant 0 : index
    %c0_40 = arith.constant 0 : index
    %126 = vector.load %arg8[%c0_38, %c0_39, %c0_40] : memref<10x32x49xf32, #tpu.memory_space<vmem>>, vector<10x32x49xf32>
    tpu.vector_store %arg8[%c0_38, %c0_39, %c0_40], %125 {strides = array<i32>} : memref<10x32x49xf32, #tpu.memory_space<vmem>>, vector<10x32x49xf32>,
    return
  }
  func.func @transform_0(%arg0: i32) -> (i32, i32, i32) {
    %c0_i32 = arith.constant 0 : i32
    %c0_i32_0 = arith.constant 0 : i32
    %c0_i32_1 = arith.constant 0 : i32
    return %arg0, %c0_i32, %c0_i32_0 : i32, i32, i32
  }
  func.func @transform_1(%arg0: i32) -> (i32, i32, i32) {
    %c0_i32 = arith.constant 0 : i32
    %c0_i32_0 = arith.constant 0 : i32
    %c0_i32_1 = arith.constant 0 : i32
    %c0_i32_2 = arith.constant 0 : i32
    return %c0_i32, %c0_i32_0, %c0_i32_1 : i32, i32, i32
  }
  func.func @transform_2(%arg0: i32) -> (i32, i32, i32) {
    %c0_i32 = arith.constant 0 : i32
    %c0_i32_0 = arith.constant 0 : i32
    %c0_i32_1 = arith.constant 0 : i32
    %c0_i32_2 = arith.constant 0 : i32
    return %c0_i32, %c0_i32_0, %c0_i32_1 : i32, i32, i32
  }
  func.func @transform_3(%arg0: i32) -> (i32, i32, i32) {
    %c0_i32 = arith.constant 0 : i32
    %c0_i32_0 = arith.constant 0 : i32
    %c0_i32_1 = arith.constant 0 : i32
    %c0_i32_2 = arith.constant 0 : i32
    return %c0_i32, %c0_i32_0, %c0_i32_1 : i32, i32, i32
  }
  func.func @transform_4(%arg0: i32) -> (i32, i32, i32) {
    %c0_i32 = arith.constant 0 : i32
    %c0_i32_0 = arith.constant 0 : i32
    %c0_i32_1 = arith.constant 0 : i32
    %c0_i32_2 = arith.constant 0 : i32
    return %c0_i32, %c0_i32_0, %c0_i32_1 : i32, i32, i32
  }
  func.func @transform_5(%arg0: i32) -> (i32, i32, i32) {
    %c0_i32 = arith.constant 0 : i32
    %c0_i32_0 = arith.constant 0 : i32
    %c0_i32_1 = arith.constant 0 : i32
    %c0_i32_2 = arith.constant 0 : i32
    return %c0_i32, %c0_i32_0, %c0_i32_1 : i32, i32, i32
  }
  func.func @transform_6(%arg0: i32) -> (i32, i32, i32) {
    %c0_i32 = arith.constant 0 : i32
    %c0_i32_0 = arith.constant 0 : i32
    %c0_i32_1 = arith.constant 0 : i32
    %c0_i32_2 = arith.constant 0 : i32
    return %c0_i32, %c0_i32_0, %c0_i32_1 : i32, i32, i32
  }
  func.func @transform_7(%arg0: i32) -> (i32, i32, i32) {
    %c0_i32 = arith.constant 0 : i32
    %c0_i32_0 = arith.constant 0 : i32
    %c0_i32_1 = arith.constant 0 : i32
    return %arg0, %c0_i32, %c0_i32_0 : i32, i32, i32
  }
}

</mosaic_0001>

<llo_original>
// kernel: tpu_custom_call.1
$region0: #{tpu_custom_call.1}
  #allocation0 [shape = 'u32[]', space=smem, size = 0x4, offset = 0x4, fixed_abs, tag = 'smem constant byte address 0x4 - core index']
  #allocation1 [shape = 'u32[144,128]{1,0:T(1,128)}', space=vmem, size = 0x12000, scoped, tag = 'internal scratch']
  #allocation2 [shape = 'f32[1,1,1]{2,1,0:T(1,128)S(1)}', space=vmem, size = 0x200, scoped, tag = 'scoped memory for tpu_custom_call.1']
  %s0 = inlined_call_operand.hbm [shape: f32[10,32,49], index: 0, kind: input, shape index: {}]
  %s1 = inlined_call_operand.vmem [shape: f32[1,32,2], index: 1, kind: input, shape index: {}]
  %s2 = inlined_call_operand.vmem [shape: f32[1,32,2], index: 2, kind: input, shape index: {}]
  %s3 = inlined_call_operand.vmem [shape: f32[1,1,49], index: 3, kind: input, shape index: {}]
  %s4 = inlined_call_operand.vmem [shape: f32[1,1,49], index: 4, kind: input, shape index: {}]
  %s5 = inlined_call_operand.<no memory space> [shape: f32[1,1,1], index: 5, kind: input, shape index: {}]
  %s6 = inlined_call_operand.vmem [shape: f32[1,2,441], index: 6, kind: input, shape index: {}]
  %s7 = inlined_call_operand.hbm [shape: f32[10,32,49], index: 7, kind: output, shape index: {}]
  %s8 = sld [smem:[#allocation0]]
  $region42: #{tpu_custom_call.1} parent=0
    _
  %s10 = ssub.s32 1, %s8
  %s11 = scalar_select 0, %s10, %s8
  %v12 = vstv %s5
  %13 = vst [vmem:[#allocation2] sm:$0x1] %v12
  $region1: #{tpu_custom_call.1} parent=0
    #allocation3 [shape = 'u8[163840]{0}', space=vmem, size = 0x28000, scoped, tag = 'input window, operand 0, single buffered']
    #allocation4 [shape = 's32[1]{0}', space=sflag, size = 0x4, scoped, tag = 'scoped memory for tpu_custom_call.1']
    #allocation5 [shape = 's32[1]{0}', space=sflag, size = 0x4, scoped, tag = 'scoped memory for tpu_custom_call.1']
    #allocation6 [shape = 'u8[163840]{0}', space=vmem, size = 0x28000, scoped, tag = 'output window, operand 0, single buffered']
    %14 = vsyncpa [#allocation4], 0
    %15 = vsyncpa [#allocation5], 0
    // Predicated region
    $region2: #{tpu_custom_call.1} parent=1 // pred_check
      _
    $region3: #{tpu_custom_call.1} parent=1 // pred_check_branch
      %17 = sbr.rel (0) target = $region5
    $region4: #{tpu_custom_call.1} parent=1 // pred_region
      %s19 = ssub.s32 5120, 5120
      %20 = vsyncadd [#allocation4], %s19
      %s21 = sshll.u32 [#allocation3], 4
      %s22 = int_to_ptr.vmem [resolvable:$true] %s21
      %27 = dma.hbm_to_vmem [thread:$0]  %s0, 5120, %s22, [#allocation4], 128, 128, 8
    $region5: #{tpu_custom_call.1} parent=1 // pred_fallthru
      _
    // Predicated region
    $region6: #{tpu_custom_call.1} parent=1 // pred_check
      _
    $region7: #{tpu_custom_call.1} parent=1 // pred_check_branch
      %29 = sbr.rel (0) target = $region9
    $region8: #{tpu_custom_call.1} parent=1 // pred_region
      _
    $region9: #{tpu_custom_call.1} parent=1 // pred_fallthru
      _
    // Predicated region
    $region10: #{tpu_custom_call.1} parent=1 // pred_check
      _
    $region11: #{tpu_custom_call.1} parent=1 // pred_check_branch
      %31 = sbr.rel (0) target = $region13
    $region12: #{tpu_custom_call.1} parent=1 // pred_region
      _
    $region13: #{tpu_custom_call.1} parent=1 // pred_fallthru
      _
    // Predicated region
    $region14: #{tpu_custom_call.1} parent=1 // pred_check
      _
    $region15: #{tpu_custom_call.1} parent=1 // pred_check_branch
      %33 = sbr.rel (0) target = $region17
    $region16: #{tpu_custom_call.1} parent=1 // pred_region
      _
    $region17: #{tpu_custom_call.1} parent=1 // pred_fallthru
      _
    // Predicated region
    $region18: #{tpu_custom_call.1} parent=1 // pred_check
      _
    $region19: #{tpu_custom_call.1} parent=1 // pred_check_branch
      %35 = sbr.rel (0) target = $region21
    $region20: #{tpu_custom_call.1} parent=1 // pred_region
      _
    $region21: #{tpu_custom_call.1} parent=1 // pred_fallthru
      _
    // Predicated region
    $region22: #{tpu_custom_call.1} parent=1 // pred_check
      _
    $region23: #{tpu_custom_call.1} parent=1 // pred_check_branch
      %37 = sbr.rel (0) target = $region25
    $region24: #{tpu_custom_call.1} parent=1 // pred_region
      _
    $region25: #{tpu_custom_call.1} parent=1 // pred_fallthru
      _
    // Predicated region
    $region26: #{tpu_custom_call.1} parent=1 // pred_check
      _
    $region27: #{tpu_custom_call.1} parent=1 // pred_check_branch
      %39 = sbr.rel (0) target = $region29
    $region28: #{tpu_custom_call.1} parent=1 // pred_region
      _
    $region29: #{tpu_custom_call.1} parent=1 // pred_fallthru
      _
    // Predicated region
    $region30: #{tpu_custom_call.1} parent=1 // pred_check
      _
    $region31: #{tpu_custom_call.1} parent=1 // pred_check_branch
      %41 = sbr.rel (0) target = $region33
    $region32: #{tpu_custom_call.1} parent=1 // pred_region
      %42 = dma.done [#allocation4], 5120
    $region33: #{tpu_custom_call.1} parent=1 // pred_fallthru
      _
    %v43 = vld [vmem:[#allocation3] sm:$0xff]
    %v44 = vld [vmem:[#allocation3 + $0x8] sm:$0xff]
    %v45 = vld [vmem:[#allocation3 + $0x10] sm:$0xff]
    %v46 = vld [vmem:[#allocation3 + $0x18] sm:$0xff]
    %v47 = vld [vmem:[#allocation3 + $0x20] sm:$0xff]
    %v48 = vld [vmem:[#allocation3 + $0x28] sm:$0xff]
    %v49 = vld [vmem:[#allocation3 + $0x30] sm:$0xff]
    %v50 = vld [vmem:[#allocation3 + $0x38] sm:$0xff]
    %v51 = vld [vmem:[#allocation3 + $0x40] sm:$0xff]
    %v52 = vld [vmem:[#allocation3 + $0x48] sm:$0xff]
    %v53 = vld [vmem:[#allocation3 + $0x50] sm:$0xff]
    %v54 = vld [vmem:[#allocation3 + $0x58] sm:$0xff]
    %v55 = vld [vmem:[#allocation3 + $0x60] sm:$0xff]
    %v56 = vld [vmem:[#allocation3 + $0x68] sm:$0xff]
    %v57 = vld [vmem:[#allocation3 + $0x70] sm:$0xff]
    %v58 = vld [vmem:[#allocation3 + $0x78] sm:$0xff]
    %v59 = vld [vmem:[#allocation3 + $0x80] sm:$0xff]
    %v60 = vld [vmem:[#allocation3 + $0x88] sm:$0xff]
    %v61 = vld [vmem:[#allocation3 + $0x90] sm:$0xff]
    %v62 = vld [vmem:[#allocation3 + $0x98] sm:$0xff]
    %v63 = vld [vmem:[#allocation3 + $0xa0] sm:$0xff]
    %v64 = vld [vmem:[#allocation3 + $0xa8] sm:$0xff]
    %v65 = vld [vmem:[#allocation3 + $0xb0] sm:$0xff]
    %v66 = vld [vmem:[#allocation3 + $0xb8] sm:$0xff]
    %v67 = vld [vmem:[#allocation3 + $0xc0] sm:$0xff]
    %v68 = vld [vmem:[#allocation3 + $0xc8] sm:$0xff]
    %v69 = vld [vmem:[#allocation3 + $0xd0] sm:$0xff]
    %v70 = vld [vmem:[#allocation3 + $0xd8] sm:$0xff]
    %v71 = vld [vmem:[#allocation3 + $0xe0] sm:$0xff]
    %v72 = vld [vmem:[#allocation3 + $0xe8] sm:$0xff]
    %v73 = vld [vmem:[#allocation3 + $0xf0] sm:$0xff]
    %v74 = vld [vmem:[#allocation3 + $0xf8] sm:$0xff]
    %v75 = vld [vmem:[#allocation3 + $0x100] sm:$0xff]
    %v76 = vld [vmem:[#allocation3 + $0x108] sm:$0xff]
    %v77 = vld [vmem:[#allocation3 + $0x110] sm:$0xff]
    %v78 = vld [vmem:[#allocation3 + $0x118] sm:$0xff]
    %v79 = vld [vmem:[#allocation3 + $0x120] sm:$0xff]
    %v80 = vld [vmem:[#allocation3 + $0x128] sm:$0xff]
    %v81 = vld [vmem:[#allocation3 + $0x130] sm:$0xff]
    %v82 = vld [vmem:[#allocation3 + $0x138] sm:$0xff]
    %vm83 = vcmask 400384
    %v84 = vsel %vm83, %v43, 0.0
    %85 = vadd.xlane.f32.xlu0 %v84
    %v86 = vpop.xlane.xlu0 %85
    %v87 = vsel %vm83, %v44, 0.0
    %88 = vadd.xlane.f32.xlu0 %v87
    %v89 = vpop.xlane.xlu0 %88
    %v90 = vsel %vm83, %v45, 0.0
    %91 = vadd.xlane.f32.xlu0 %v90
    %v92 = vpop.xlane.xlu0 %91
    %v93 = vsel %vm83, %v46, 0.0
    %94 = vadd.xlane.f32.xlu0 %v93
    %v95 = vpop.xlane.xlu0 %94
    %v96 = vsel %vm83, %v47, 0.0
    %97 = vadd.xlane.f32.xlu0 %v96
    %v98 = vpop.xlane.xlu0 %97
    %v99 = vsel %vm83, %v48, 0.0
    %100 = vadd.xlane.f32.xlu0 %v99
    %v101 = vpop.xlane.xlu0 %100
    %v102 = vsel %vm83, %v49, 0.0
    %103 = vadd.xlane.f32.xlu0 %v102
    %v104 = vpop.xlane.xlu0 %103
    %v105 = vsel %vm83, %v50, 0.0
    %106 = vadd.xlane.f32.xlu0 %v105
    %v107 = vpop.xlane.xlu0 %106
    %v108 = vsel %vm83, %v51, 0.0
    %109 = vadd.xlane.f32.xlu0 %v108
    %v110 = vpop.xlane.xlu0 %109
    %v111 = vsel %vm83, %v52, 0.0
    %112 = vadd.xlane.f32.xlu0 %v111
    %v113 = vpop.xlane.xlu0 %112
    %v114 = vsel %vm83, %v53, 0.0
    %115 = vadd.xlane.f32.xlu0 %v114
    %v116 = vpop.xlane.xlu0 %115
    %v117 = vsel %vm83, %v54, 0.0
    %118 = vadd.xlane.f32.xlu0 %v117
    %v119 = vpop.xlane.xlu0 %118
    %v120 = vsel %vm83, %v55, 0.0
    %121 = vadd.xlane.f32.xlu0 %v120
    %v122 = vpop.xlane.xlu0 %121
    %v123 = vsel %vm83, %v56, 0.0
    %124 = vadd.xlane.f32.xlu0 %v123
    %v125 = vpop.xlane.xlu0 %124
    %v126 = vsel %vm83, %v57, 0.0
    %127 = vadd.xlane.f32.xlu0 %v126
    %v128 = vpop.xlane.xlu0 %127
    %v129 = vsel %vm83, %v58, 0.0
    %130 = vadd.xlane.f32.xlu0 %v129
    %v131 = vpop.xlane.xlu0 %130
    %v132 = vsel %vm83, %v59, 0.0
    %133 = vadd.xlane.f32.xlu0 %v132
    %v134 = vpop.xlane.xlu0 %133
    %v135 = vsel %vm83, %v60, 0.0
    %136 = vadd.xlane.f32.xlu0 %v135
    %v137 = vpop.xlane.xlu0 %136
    %v138 = vsel %vm83, %v61, 0.0
    %139 = vadd.xlane.f32.xlu0 %v138
    %v140 = vpop.xlane.xlu0 %139
    %v141 = vsel %vm83, %v62, 0.0
    %142 = vadd.xlane.f32.xlu0 %v141
    %v143 = vpop.xlane.xlu0 %142
    %v144 = vsel %vm83, %v63, 0.0
    %145 = vadd.xlane.f32.xlu0 %v144
    %v146 = vpop.xlane.xlu0 %145
    %v147 = vsel %vm83, %v64, 0.0
    %148 = vadd.xlane.f32.xlu0 %v147
    %v149 = vpop.xlane.xlu0 %148
    %v150 = vsel %vm83, %v65, 0.0
    %151 = vadd.xlane.f32.xlu0 %v150
    %v152 = vpop.xlane.xlu0 %151
    %v153 = vsel %vm83, %v66, 0.0
    %154 = vadd.xlane.f32.xlu0 %v153
    %v155 = vpop.xlane.xlu0 %154
    %v156 = vsel %vm83, %v67, 0.0
    %157 = vadd.xlane.f32.xlu0 %v156
    %v158 = vpop.xlane.xlu0 %157
    %v159 = vsel %vm83, %v68, 0.0
    %160 = vadd.xlane.f32.xlu0 %v159
    %v161 = vpop.xlane.xlu0 %160
    %v162 = vsel %vm83, %v69, 0.0
    %163 = vadd.xlane.f32.xlu0 %v162
    %v164 = vpop.xlane.xlu0 %163
    %v165 = vsel %vm83, %v70, 0.0
    %166 = vadd.xlane.f32.xlu0 %v165
    %v167 = vpop.xlane.xlu0 %166
    %v168 = vsel %vm83, %v71, 0.0
    %169 = vadd.xlane.f32.xlu0 %v168
    %v170 = vpop.xlane.xlu0 %169
    %v171 = vsel %vm83, %v72, 0.0
    %172 = vadd.xlane.f32.xlu0 %v171
    %v173 = vpop.xlane.xlu0 %172
    %v174 = vsel %vm83, %v73, 0.0
    %175 = vadd.xlane.f32.xlu0 %v174
    %v176 = vpop.xlane.xlu0 %175
    %v177 = vsel %vm83, %v74, 0.0
    %178 = vadd.xlane.f32.xlu0 %v177
    %v179 = vpop.xlane.xlu0 %178
    %v180 = vsel %vm83, %v75, 0.0
    %181 = vadd.xlane.f32.xlu0 %v180
    %v182 = vpop.xlane.xlu0 %181
    %v183 = vsel %vm83, %v76, 0.0
    %184 = vadd.xlane.f32.xlu0 %v183
    %v185 = vpop.xlane.xlu0 %184
    %v186 = vsel %vm83, %v77, 0.0
    %187 = vadd.xlane.f32.xlu0 %v186
    %v188 = vpop.xlane.xlu0 %187
    %v189 = vsel %vm83, %v78, 0.0
    %190 = vadd.xlane.f32.xlu0 %v189
    %v191 = vpop.xlane.xlu0 %190
    %v192 = vsel %vm83, %v79, 0.0
    %193 = vadd.xlane.f32.xlu0 %v192
    %v194 = vpop.xlane.xlu0 %193
    %v195 = vsel %vm83, %v80, 0.0
    %196 = vadd.xlane.f32.xlu0 %v195
    %v197 = vpop.xlane.xlu0 %196
    %v198 = vsel %vm83, %v81, 0.0
    %199 = vadd.xlane.f32.xlu0 %v198
    %v200 = vpop.xlane.xlu0 %199
    %v201 = vsel %vm83, %v82, 0.0
    %202 = vadd.xlane.f32.xlu0 %v201
    %v203 = vpop.xlane.xlu0 %202
    %v204 = vrcp.pop 49.0
    %v205 = vmul.f32 %v86, %v204
    %v206 = vmul.f32 %v89, %v204
    %v207 = vmul.f32 %v92, %v204
    %v208 = vmul.f32 %v95, %v204
    %v209 = vmul.f32 %v98, %v204
    %v210 = vmul.f32 %v101, %v204
    %v211 = vmul.f32 %v104, %v204
    %v212 = vmul.f32 %v107, %v204
    %v213 = vmul.f32 %v110, %v204
    %v214 = vmul.f32 %v113, %v204
    %v215 = vmul.f32 %v116, %v204
    %v216 = vmul.f32 %v119, %v204
    %v217 = vmul.f32 %v122, %v204
    %v218 = vmul.f32 %v125, %v204
    %v219 = vmul.f32 %v128, %v204
    %v220 = vmul.f32 %v131, %v204
    %v221 = vmul.f32 %v134, %v204
    %v222 = vmul.f32 %v137, %v204
    %v223 = vmul.f32 %v140, %v204
    %v224 = vmul.f32 %v143, %v204
    %v225 = vmul.f32 %v146, %v204
    %v226 = vmul.f32 %v149, %v204
    %v227 = vmul.f32 %v152, %v204
    %v228 = vmul.f32 %v155, %v204
    %v229 = vmul.f32 %v158, %v204
    %v230 = vmul.f32 %v161, %v204
    %v231 = vmul.f32 %v164, %v204
    %v232 = vmul.f32 %v167, %v204
    %v233 = vmul.f32 %v170, %v204
    %v234 = vmul.f32 %v173, %v204
    %v235 = vmul.f32 %v176, %v204
    %v236 = vmul.f32 %v179, %v204
    %v237 = vmul.f32 %v182, %v204
    %v238 = vmul.f32 %v185, %v204
    %v239 = vmul.f32 %v188, %v204
    %v240 = vmul.f32 %v191, %v204
    %v241 = vmul.f32 %v194, %v204
    %v242 = vmul.f32 %v197, %v204
    %v243 = vmul.f32 %v200, %v204
    %v244 = vmul.f32 %v203, %v204
    %v245 = vsel %vm83, %v43, -inf
    %246 = vmax.xlane.f32.xlu0 %v245
    %v247 = vpop.xlane.xlu0 %246
    %v248 = vsel %vm83, %v44, -inf
    %249 = vmax.xlane.f32.xlu0 %v248
    %v250 = vpop.xlane.xlu0 %249
    %v251 = vsel %vm83, %v45, -inf
    %252 = vmax.xlane.f32.xlu0 %v251
    %v253 = vpop.xlane.xlu0 %252
    %v254 = vsel %vm83, %v46, -inf
    %255 = vmax.xlane.f32.xlu0 %v254
    %v256 = vpop.xlane.xlu0 %255
    %v257 = vsel %vm83, %v47, -inf
    %258 = vmax.xlane.f32.xlu0 %v257
    %v259 = vpop.xlane.xlu0 %258
    %v260 = vsel %vm83, %v48, -inf
    %261 = vmax.xlane.f32.xlu0 %v260
    %v262 = vpop.xlane.xlu0 %261
    %v263 = vsel %vm83, %v49, -inf
    %264 = vmax.xlane.f32.xlu0 %v263
    %v265 = vpop.xlane.xlu0 %264
    %v266 = vsel %vm83, %v50, -inf
    %267 = vmax.xlane.f32.xlu0 %v266
    %v268 = vpop.xlane.xlu0 %267
    %v269 = vsel %vm83, %v51, -inf
    %270 = vmax.xlane.f32.xlu0 %v269
    %v271 = vpop.xlane.xlu0 %270
    %v272 = vsel %vm83, %v52, -inf
    %273 = vmax.xlane.f32.xlu0 %v272
    %v274 = vpop.xlane.xlu0 %273
    %v275 = vsel %vm83, %v53, -inf
    %276 = vmax.xlane.f32.xlu0 %v275
    %v277 = vpop.xlane.xlu0 %276
    %v278 = vsel %vm83, %v54, -inf
    %279 = vmax.xlane.f32.xlu0 %v278
    %v280 = vpop.xlane.xlu0 %279
    %v281 = vsel %vm83, %v55, -inf
    %282 = vmax.xlane.f32.xlu0 %v281
    %v283 = vpop.xlane.xlu0 %282
    %v284 = vsel %vm83, %v56, -inf
    %285 = vmax.xlane.f32.xlu0 %v284
    %v286 = vpop.xlane.xlu0 %285
    %v287 = vsel %vm83, %v57, -inf
    %288 = vmax.xlane.f32.xlu0 %v287
    %v289 = vpop.xlane.xlu0 %288
    %v290 = vsel %vm83, %v58, -inf
    %291 = vmax.xlane.f32.xlu0 %v290
    %v292 = vpop.xlane.xlu0 %291
    %v293 = vsel %vm83, %v59, -inf
    %294 = vmax.xlane.f32.xlu0 %v293
    %v295 = vpop.xlane.xlu0 %294
    %v296 = vsel %vm83, %v60, -inf
    %297 = vmax.xlane.f32.xlu0 %v296
    %v298 = vpop.xlane.xlu0 %297
    %v299 = vsel %vm83, %v61, -inf
    %300 = vmax.xlane.f32.xlu0 %v299
    %v301 = vpop.xlane.xlu0 %300
    %v302 = vsel %vm83, %v62, -inf
    %303 = vmax.xlane.f32.xlu0 %v302
    %v304 = vpop.xlane.xlu0 %303
    %v305 = vsel %vm83, %v63, -inf
    %306 = vmax.xlane.f32.xlu0 %v305
    %v307 = vpop.xlane.xlu0 %306
    %v308 = vsel %vm83, %v64, -inf
    %309 = vmax.xlane.f32.xlu0 %v308
    %v310 = vpop.xlane.xlu0 %309
    %v311 = vsel %vm83, %v65, -inf
    %312 = vmax.xlane.f32.xlu0 %v311
    %v313 = vpop.xlane.xlu0 %312
    %v314 = vsel %vm83, %v66, -inf
    %315 = vmax.xlane.f32.xlu0 %v314
    %v316 = vpop.xlane.xlu0 %315
    %v317 = vsel %vm83, %v67, -inf
    %318 = vmax.xlane.f32.xlu0 %v317
    %v319 = vpop.xlane.xlu0 %318
    %v320 = vsel %vm83, %v68, -inf
    %321 = vmax.xlane.f32.xlu0 %v320
    %v322 = vpop.xlane.xlu0 %321
    %v323 = vsel %vm83, %v69, -inf
    %324 = vmax.xlane.f32.xlu0 %v323
    %v325 = vpop.xlane.xlu0 %324
    %v326 = vsel %vm83, %v70, -inf
    %327 = vmax.xlane.f32.xlu0 %v326
    %v328 = vpop.xlane.xlu0 %327
    %v329 = vsel %vm83, %v71, -inf
    %330 = vmax.xlane.f32.xlu0 %v329
    %v331 = vpop.xlane.xlu0 %330
    %v332 = vsel %vm83, %v72, -inf
    %333 = vmax.xlane.f32.xlu0 %v332
    %v334 = vpop.xlane.xlu0 %333
    %v335 = vsel %vm83, %v73, -inf
    %336 = vmax.xlane.f32.xlu0 %v335
    %v337 = vpop.xlane.xlu0 %336
    %v338 = vsel %vm83, %v74, -inf
    %339 = vmax.xlane.f32.xlu0 %v338
    %v340 = vpop.xlane.xlu0 %339
    %v341 = vsel %vm83, %v75, -inf
    %342 = vmax.xlane.f32.xlu0 %v341
    %v343 = vpop.xlane.xlu0 %342
    %v344 = vsel %vm83, %v76, -inf
    %345 = vmax.xlane.f32.xlu0 %v344
    %v346 = vpop.xlane.xlu0 %345
    %v347 = vsel %vm83, %v77, -inf
    %348 = vmax.xlane.f32.xlu0 %v347
    %v349 = vpop.xlane.xlu0 %348
    %v350 = vsel %vm83, %v78, -inf
    %351 = vmax.xlane.f32.xlu0 %v350
    %v352 = vpop.xlane.xlu0 %351
    %v353 = vsel %vm83, %v79, -inf
    %354 = vmax.xlane.f32.xlu0 %v353
    %v355 = vpop.xlane.xlu0 %354
    %v356 = vsel %vm83, %v80, -inf
    %357 = vmax.xlane.f32.xlu0 %v356
    %v358 = vpop.xlane.xlu0 %357
    %v359 = vsel %vm83, %v81, -inf
    %360 = vmax.xlane.f32.xlu0 %v359
    %v361 = vpop.xlane.xlu0 %360
    %v362 = vsel %vm83, %v82, -inf
    %363 = vmax.xlane.f32.xlu0 %v362
    %v364 = vpop.xlane.xlu0 %363
    %v365 = vld [vmem:[%s1] sm:$0xff]
    %v366 = vld [vmem:[%s1 + $0x8] sm:$0xff]
    %v367 = vld [vmem:[%s1 + $0x10] sm:$0xff]
    %v368 = vld [vmem:[%s1 + $0x18] sm:$0xff]
    %v369 = vld [vmem:[%s2] sm:$0xff]
    %v370 = vld [vmem:[%s2 + $0x8] sm:$0xff]
    %v371 = vld [vmem:[%s2 + $0x10] sm:$0xff]
    %v372 = vld [vmem:[%s2 + $0x18] sm:$0xff]
    %v373 = vmul.f32 %v205, %v365
    %v374 = vmul.f32 %v206, %v366
    %v375 = vmul.f32 %v207, %v367
    %v376 = vmul.f32 %v208, %v368
    %v377 = vmul.f32 %v209, %v365
    %v378 = vmul.f32 %v210, %v366
    %v379 = vmul.f32 %v211, %v367
    %v380 = vmul.f32 %v212, %v368
    %v381 = vmul.f32 %v213, %v365
    %v382 = vmul.f32 %v214, %v366
    %v383 = vmul.f32 %v215, %v367
    %v384 = vmul.f32 %v216, %v368
    %v385 = vmul.f32 %v217, %v365
    %v386 = vmul.f32 %v218, %v366
    %v387 = vmul.f32 %v219, %v367
    %v388 = vmul.f32 %v220, %v368
    %v389 = vmul.f32 %v221, %v365
    %v390 = vmul.f32 %v222, %v366
    %v391 = vmul.f32 %v223, %v367
    %v392 = vmul.f32 %v224, %v368
    %v393 = vmul.f32 %v225, %v365
    %v394 = vmul.f32 %v226, %v366
    %v395 = vmul.f32 %v227, %v367
    %v396 = vmul.f32 %v228, %v368
    %v397 = vmul.f32 %v229, %v365
    %v398 = vmul.f32 %v230, %v366
    %v399 = vmul.f32 %v231, %v367
    %v400 = vmul.f32 %v232, %v368
    %v401 = vmul.f32 %v233, %v365
    %v402 = vmul.f32 %v234, %v366
    %v403 = vmul.f32 %v235, %v367
    %v404 = vmul.f32 %v236, %v368
    %v405 = vmul.f32 %v237, %v365
    %v406 = vmul.f32 %v238, %v366
    %v407 = vmul.f32 %v239, %v367
    %v408 = vmul.f32 %v240, %v368
    %v409 = vmul.f32 %v241, %v365
    %v410 = vmul.f32 %v242, %v366
    %v411 = vmul.f32 %v243, %v367
    %v412 = vmul.f32 %v244, %v368
    %vm413 = vcmask 15360
    %v414 = vsel %vm413, %v373, 0.0
    %v415 = vsel %vm413, %v374, 0.0
    %v416 = vadd.f32 %v414, %v415
    %v417 = vsel %vm413, %v375, 0.0
    %v418 = vadd.f32 %v416, %v417
    %v419 = vsel %vm413, %v376, 0.0
    %v420 = vadd.f32 %v418, %v419
    %v421 = vrot.slane %v420, 4
    %v422 = vadd.f32 %v420, %v421
    %v423 = vrot.slane %v422, 2
    %v424 = vadd.f32 %v422, %v423
    %v425 = vrot.slane %v424, 1
    %v426 = vadd.f32 %v424, %v425
    %v427 = vsel %vm413, %v377, 0.0
    %v428 = vsel %vm413, %v378, 0.0
    %v429 = vadd.f32 %v427, %v428
    %v430 = vsel %vm413, %v379, 0.0
    %v431 = vadd.f32 %v429, %v430
    %v432 = vsel %vm413, %v380, 0.0
    %v433 = vadd.f32 %v431, %v432
    %v434 = vrot.slane %v433, 4
    %v435 = vadd.f32 %v433, %v434
    %v436 = vrot.slane %v435, 2
    %v437 = vadd.f32 %v435, %v436
    %v438 = vrot.slane %v437, 1
    %v439 = vadd.f32 %v437, %v438
    %v440 = vsel %vm413, %v381, 0.0
    %v441 = vsel %vm413, %v382, 0.0
    %v442 = vadd.f32 %v440, %v441
    %v443 = vsel %vm413, %v383, 0.0
    %v444 = vadd.f32 %v442, %v443
    %v445 = vsel %vm413, %v384, 0.0
    %v446 = vadd.f32 %v444, %v445
    %v447 = vrot.slane %v446, 4
    %v448 = vadd.f32 %v446, %v447
    %v449 = vrot.slane %v448, 2
    %v450 = vadd.f32 %v448, %v449
    %v451 = vrot.slane %v450, 1
    %v452 = vadd.f32 %v450, %v451
    %v453 = vsel %vm413, %v385, 0.0
    %v454 = vsel %vm413, %v386, 0.0
    %v455 = vadd.f32 %v453, %v454
    %v456 = vsel %vm413, %v387, 0.0
    %v457 = vadd.f32 %v455, %v456
    %v458 = vsel %vm413, %v388, 0.0
    %v459 = vadd.f32 %v457, %v458
    %v460 = vrot.slane %v459, 4
    %v461 = vadd.f32 %v459, %v460
    %v462 = vrot.slane %v461, 2
    %v463 = vadd.f32 %v461, %v462
    %v464 = vrot.slane %v463, 1
    %v465 = vadd.f32 %v463, %v464
    %v466 = vsel %vm413, %v389, 0.0
    %v467 = vsel %vm413, %v390, 0.0
    %v468 = vadd.f32 %v466, %v467
    %v469 = vsel %vm413, %v391, 0.0
    %v470 = vadd.f32 %v468, %v469
    %v471 = vsel %vm413, %v392, 0.0
    %v472 = vadd.f32 %v470, %v471
    %v473 = vrot.slane %v472, 4
    %v474 = vadd.f32 %v472, %v473
    %v475 = vrot.slane %v474, 2
    %v476 = vadd.f32 %v474, %v475
    %v477 = vrot.slane %v476, 1
    %v478 = vadd.f32 %v476, %v477
    %v479 = vsel %vm413, %v393, 0.0
    %v480 = vsel %vm413, %v394, 0.0
    %v481 = vadd.f32 %v479, %v480
    %v482 = vsel %vm413, %v395, 0.0
    %v483 = vadd.f32 %v481, %v482
    %v484 = vsel %vm413, %v396, 0.0
    %v485 = vadd.f32 %v483, %v484
    %v486 = vrot.slane %v485, 4
    %v487 = vadd.f32 %v485, %v486
    %v488 = vrot.slane %v487, 2
    %v489 = vadd.f32 %v487, %v488
    %v490 = vrot.slane %v489, 1
    %v491 = vadd.f32 %v489, %v490
    %v492 = vsel %vm413, %v397, 0.0
    %v493 = vsel %vm413, %v398, 0.0
    %v494 = vadd.f32 %v492, %v493
    %v495 = vsel %vm413, %v399, 0.0
    %v496 = vadd.f32 %v494, %v495
    %v497 = vsel %vm413, %v400, 0.0
    %v498 = vadd.f32 %v496, %v497
    %v499 = vrot.slane %v498, 4
    %v500 = vadd.f32 %v498, %v499
    %v501 = vrot.slane %v500, 2
    %v502 = vadd.f32 %v500, %v501
    %v503 = vrot.slane %v502, 1
    %v504 = vadd.f32 %v502, %v503
    %v505 = vsel %vm413, %v401, 0.0
    %v506 = vsel %vm413, %v402, 0.0
    %v507 = vadd.f32 %v505, %v506
    %v508 = vsel %vm413, %v403, 0.0
    %v509 = vadd.f32 %v507, %v508
    %v510 = vsel %vm413, %v404, 0.0
    %v511 = vadd.f32 %v509, %v510
    %v512 = vrot.slane %v511, 4
    %v513 = vadd.f32 %v511, %v512
    %v514 = vrot.slane %v513, 2
    %v515 = vadd.f32 %v513, %v514
    %v516 = vrot.slane %v515, 1
    %v517 = vadd.f32 %v515, %v516
    %v518 = vsel %vm413, %v405, 0.0
    %v519 = vsel %vm413, %v406, 0.0
    %v520 = vadd.f32 %v518, %v519
    %v521 = vsel %vm413, %v407, 0.0
    %v522 = vadd.f32 %v520, %v521
    %v523 = vsel %vm413, %v408, 0.0
    %v524 = vadd.f32 %v522, %v523
    %v525 = vrot.slane %v524, 4
    %v526 = vadd.f32 %v524, %v525
    %v527 = vrot.slane %v526, 2
    %v528 = vadd.f32 %v526, %v527
    %v529 = vrot.slane %v528, 1
    %v530 = vadd.f32 %v528, %v529
    %v531 = vsel %vm413, %v409, 0.0
    %v532 = vsel %vm413, %v410, 0.0
    %v533 = vadd.f32 %v531, %v532
    %v534 = vsel %vm413, %v411, 0.0
    %v535 = vadd.f32 %v533, %v534
    %v536 = vsel %vm413, %v412, 0.0
    %v537 = vadd.f32 %v535, %v536
    %v538 = vrot.slane %v537, 4
    %v539 = vadd.f32 %v537, %v538
    %v540 = vrot.slane %v539, 2
    %v541 = vadd.f32 %v539, %v540
    %v542 = vrot.slane %v541, 1
    %v543 = vadd.f32 %v541, %v542
    %v544 = vmax.f32 %v426, 0.0
    %v545 = vmax.f32 %v439, 0.0
    %v546 = vmax.f32 %v452, 0.0
    %v547 = vmax.f32 %v465, 0.0
    %v548 = vmax.f32 %v478, 0.0
    %v549 = vmax.f32 %v491, 0.0
    %v550 = vmax.f32 %v504, 0.0
    %v551 = vmax.f32 %v517, 0.0
    %v552 = vmax.f32 %v530, 0.0
    %v553 = vmax.f32 %v543, 0.0
    %v554 = vmul.f32 %v247, %v365
    %v555 = vmul.f32 %v250, %v366
    %v556 = vmul.f32 %v253, %v367
    %v557 = vmul.f32 %v256, %v368
    %v558 = vmul.f32 %v259, %v365
    %v559 = vmul.f32 %v262, %v366
    %v560 = vmul.f32 %v265, %v367
    %v561 = vmul.f32 %v268, %v368
    %v562 = vmul.f32 %v271, %v365
    %v563 = vmul.f32 %v274, %v366
    %v564 = vmul.f32 %v277, %v367
    %v565 = vmul.f32 %v280, %v368
    %v566 = vmul.f32 %v283, %v365
    %v567 = vmul.f32 %v286, %v366
    %v568 = vmul.f32 %v289, %v367
    %v569 = vmul.f32 %v292, %v368
    %v570 = vmul.f32 %v295, %v365
    %v571 = vmul.f32 %v298, %v366
    %v572 = vmul.f32 %v301, %v367
    %v573 = vmul.f32 %v304, %v368
    %v574 = vmul.f32 %v307, %v365
    %v575 = vmul.f32 %v310, %v366
    %v576 = vmul.f32 %v313, %v367
    %v577 = vmul.f32 %v316, %v368
    %v578 = vmul.f32 %v319, %v365
    %v579 = vmul.f32 %v322, %v366
    %v580 = vmul.f32 %v325, %v367
    %v581 = vmul.f32 %v328, %v368
    %v582 = vmul.f32 %v331, %v365
    %v583 = vmul.f32 %v334, %v366
    %v584 = vmul.f32 %v337, %v367
    %v585 = vmul.f32 %v340, %v368
    %v586 = vmul.f32 %v343, %v365
    %v587 = vmul.f32 %v346, %v366
    %v588 = vmul.f32 %v349, %v367
    %v589 = vmul.f32 %v352, %v368
    %v590 = vmul.f32 %v355, %v365
    %v591 = vmul.f32 %v358, %v366
    %v592 = vmul.f32 %v361, %v367
    %v593 = vmul.f32 %v364, %v368
    %v594 = vsel %vm413, %v554, 0.0
    %v595 = vsel %vm413, %v555, 0.0
    %v596 = vadd.f32 %v594, %v595
    %v597 = vsel %vm413, %v556, 0.0
    %v598 = vadd.f32 %v596, %v597
    %v599 = vsel %vm413, %v557, 0.0
    %v600 = vadd.f32 %v598, %v599
    %v601 = vrot.slane %v600, 4
    %v602 = vadd.f32 %v600, %v601
    %v603 = vrot.slane %v602, 2
    %v604 = vadd.f32 %v602, %v603
    %v605 = vrot.slane %v604, 1
    %v606 = vadd.f32 %v604, %v605
    %v607 = vsel %vm413, %v558, 0.0
    %v608 = vsel %vm413, %v559, 0.0
    %v609 = vadd.f32 %v607, %v608
    %v610 = vsel %vm413, %v560, 0.0
    %v611 = vadd.f32 %v609, %v610
    %v612 = vsel %vm413, %v561, 0.0
    %v613 = vadd.f32 %v611, %v612
    %v614 = vrot.slane %v613, 4
    %v615 = vadd.f32 %v613, %v614
    %v616 = vrot.slane %v615, 2
    %v617 = vadd.f32 %v615, %v616
    %v618 = vrot.slane %v617, 1
    %v619 = vadd.f32 %v617, %v618
    %v620 = vsel %vm413, %v562, 0.0
    %v621 = vsel %vm413, %v563, 0.0
    %v622 = vadd.f32 %v620, %v621
    %v623 = vsel %vm413, %v564, 0.0
    %v624 = vadd.f32 %v622, %v623
    %v625 = vsel %vm413, %v565, 0.0
    %v626 = vadd.f32 %v624, %v625
    %v627 = vrot.slane %v626, 4
    %v628 = vadd.f32 %v626, %v627
    %v629 = vrot.slane %v628, 2
    %v630 = vadd.f32 %v628, %v629
    %v631 = vrot.slane %v630, 1
    %v632 = vadd.f32 %v630, %v631
    %v633 = vsel %vm413, %v566, 0.0
    %v634 = vsel %vm413, %v567, 0.0
    %v635 = vadd.f32 %v633, %v634
    %v636 = vsel %vm413, %v568, 0.0
    %v637 = vadd.f32 %v635, %v636
    %v638 = vsel %vm413, %v569, 0.0
    %v639 = vadd.f32 %v637, %v638
    %v640 = vrot.slane %v639, 4
    %v641 = vadd.f32 %v639, %v640
    %v642 = vrot.slane %v641, 2
    %v643 = vadd.f32 %v641, %v642
    %v644 = vrot.slane %v643, 1
    %v645 = vadd.f32 %v643, %v644
    %v646 = vsel %vm413, %v570, 0.0
    %v647 = vsel %vm413, %v571, 0.0
    %v648 = vadd.f32 %v646, %v647
    %v649 = vsel %vm413, %v572, 0.0
    %v650 = vadd.f32 %v648, %v649
    %v651 = vsel %vm413, %v573, 0.0
    %v652 = vadd.f32 %v650, %v651
    %v653 = vrot.slane %v652, 4
    %v654 = vadd.f32 %v652, %v653
    %v655 = vrot.slane %v654, 2
    %v656 = vadd.f32 %v654, %v655
    %v657 = vrot.slane %v656, 1
    %v658 = vadd.f32 %v656, %v657
    %v659 = vsel %vm413, %v574, 0.0
    %v660 = vsel %vm413, %v575, 0.0
    %v661 = vadd.f32 %v659, %v660
    %v662 = vsel %vm413, %v576, 0.0
    %v663 = vadd.f32 %v661, %v662
    %v664 = vsel %vm413, %v577, 0.0
    %v665 = vadd.f32 %v663, %v664
    %v666 = vrot.slane %v665, 4
    %v667 = vadd.f32 %v665, %v666
    %v668 = vrot.slane %v667, 2
    %v669 = vadd.f32 %v667, %v668
    %v670 = vrot.slane %v669, 1
    %v671 = vadd.f32 %v669, %v670
    %v672 = vsel %vm413, %v578, 0.0
    %v673 = vsel %vm413, %v579, 0.0
    %v674 = vadd.f32 %v672, %v673
    %v675 = vsel %vm413, %v580, 0.0
    %v676 = vadd.f32 %v674, %v675
    %v677 = vsel %vm413, %v581, 0.0
    %v678 = vadd.f32 %v676, %v677
    %v679 = vrot.slane %v678, 4
    %v680 = vadd.f32 %v678, %v679
    %v681 = vrot.slane %v680, 2
    %v682 = vadd.f32 %v680, %v681
    %v683 = vrot.slane %v682, 1
    %v684 = vadd.f32 %v682, %v683
    %v685 = vsel %vm413, %v582, 0.0
    %v686 = vsel %vm413, %v583, 0.0
    %v687 = vadd.f32 %v685, %v686
    %v688 = vsel %vm413, %v584, 0.0
    %v689 = vadd.f32 %v687, %v688
    %v690 = vsel %vm413, %v585, 0.0
    %v691 = vadd.f32 %v689, %v690
    %v692 = vrot.slane %v691, 4
    %v693 = vadd.f32 %v691, %v692
    %v694 = vrot.slane %v693, 2
    %v695 = vadd.f32 %v693, %v694
    %v696 = vrot.slane %v695, 1
    %v697 = vadd.f32 %v695, %v696
    %v698 = vsel %vm413, %v586, 0.0
    %v699 = vsel %vm413, %v587, 0.0
    %v700 = vadd.f32 %v698, %v699
    %v701 = vsel %vm413, %v588, 0.0
    %v702 = vadd.f32 %v700, %v701
    %v703 = vsel %vm413, %v589, 0.0
    %v704 = vadd.f32 %v702, %v703
    %v705 = vrot.slane %v704, 4
    %v706 = vadd.f32 %v704, %v705
    %v707 = vrot.slane %v706, 2
    %v708 = vadd.f32 %v706, %v707
    %v709 = vrot.slane %v708, 1
    %v710 = vadd.f32 %v708, %v709
    %v711 = vsel %vm413, %v590, 0.0
    %v712 = vsel %vm413, %v591, 0.0
    %v713 = vadd.f32 %v711, %v712
    %v714 = vsel %vm413, %v592, 0.0
    %v715 = vadd.f32 %v713, %v714
    %v716 = vsel %vm413, %v593, 0.0
    %v717 = vadd.f32 %v715, %v716
    %v718 = vrot.slane %v717, 4
    %v719 = vadd.f32 %v717, %v718
    %v720 = vrot.slane %v719, 2
    %v721 = vadd.f32 %v719, %v720
    %v722 = vrot.slane %v721, 1
    %v723 = vadd.f32 %v721, %v722
    %v724 = vmax.f32 %v606, 0.0
    %v725 = vmax.f32 %v619, 0.0
    %v726 = vmax.f32 %v632, 0.0
    %v727 = vmax.f32 %v645, 0.0
    %v728 = vmax.f32 %v658, 0.0
    %v729 = vmax.f32 %v671, 0.0
    %v730 = vmax.f32 %v684, 0.0
    %v731 = vmax.f32 %v697, 0.0
    %v732 = vmax.f32 %v710, 0.0
    %v733 = vmax.f32 %v723, 0.0
    %v734 = vadd.f32 %v544, %v724
    %v735 = vadd.f32 %v545, %v725
    %v736 = vadd.f32 %v546, %v726
    %v737 = vadd.f32 %v547, %v727
    %v738 = vadd.f32 %v548, %v728
    %v739 = vadd.f32 %v549, %v729
    %v740 = vadd.f32 %v550, %v730
    %v741 = vadd.f32 %v551, %v731
    %v742 = vadd.f32 %v552, %v732
    %v743 = vadd.f32 %v553, %v733
    %v744 = vmul.f32 %v734, %v369
    %v745 = vmul.f32 %v734, %v370
    %v746 = vmul.f32 %v734, %v371
    %v747 = vmul.f32 %v734, %v372
    %v748 = vmul.f32 %v735, %v369
    %v749 = vmul.f32 %v735, %v370
    %v750 = vmul.f32 %v735, %v371
    %v751 = vmul.f32 %v735, %v372
    %v752 = vmul.f32 %v736, %v369
    %v753 = vmul.f32 %v736, %v370
    %v754 = vmul.f32 %v736, %v371
    %v755 = vmul.f32 %v736, %v372
    %v756 = vmul.f32 %v737, %v369
    %v757 = vmul.f32 %v737, %v370
    %v758 = vmul.f32 %v737, %v371
    %v759 = vmul.f32 %v737, %v372
    %v760 = vmul.f32 %v738, %v369
    %v761 = vmul.f32 %v738, %v370
    %v762 = vmul.f32 %v738, %v371
    %v763 = vmul.f32 %v738, %v372
    %v764 = vmul.f32 %v739, %v369
    %v765 = vmul.f32 %v739, %v370
    %v766 = vmul.f32 %v739, %v371
    %v767 = vmul.f32 %v739, %v372
    %v768 = vmul.f32 %v740, %v369
    %v769 = vmul.f32 %v740, %v370
    %v770 = vmul.f32 %v740, %v371
    %v771 = vmul.f32 %v740, %v372
    %v772 = vmul.f32 %v741, %v369
    %v773 = vmul.f32 %v741, %v370
    %v774 = vmul.f32 %v741, %v371
    %v775 = vmul.f32 %v741, %v372
    %v776 = vmul.f32 %v742, %v369
    %v777 = vmul.f32 %v742, %v370
    %v778 = vmul.f32 %v742, %v371
    %v779 = vmul.f32 %v742, %v372
    %v780 = vmul.f32 %v743, %v369
    %v781 = vmul.f32 %v743, %v370
    %v782 = vmul.f32 %v743, %v371
    %v783 = vmul.f32 %v743, %v372
    %v784 = vsel %vm413, %v744, 0.0
    %785 = vadd.xlane.f32.xlu0 %v784
    %v786 = vpop.xlane.xlu0 %785
    %v787 = vsel %vm413, %v745, 0.0
    %788 = vadd.xlane.f32.xlu0 %v787
    %v789 = vpop.xlane.xlu0 %788
    %v790 = vsel %vm413, %v746, 0.0
    %791 = vadd.xlane.f32.xlu0 %v790
    %v792 = vpop.xlane.xlu0 %791
    %v793 = vsel %vm413, %v747, 0.0
    %794 = vadd.xlane.f32.xlu0 %v793
    %v795 = vpop.xlane.xlu0 %794
    %v796 = vsel %vm413, %v748, 0.0
    %797 = vadd.xlane.f32.xlu0 %v796
    %v798 = vpop.xlane.xlu0 %797
    %v799 = vsel %vm413, %v749, 0.0
    %800 = vadd.xlane.f32.xlu0 %v799
    %v801 = vpop.xlane.xlu0 %800
    %v802 = vsel %vm413, %v750, 0.0
    %803 = vadd.xlane.f32.xlu0 %v802
    %v804 = vpop.xlane.xlu0 %803
    %v805 = vsel %vm413, %v751, 0.0
    %806 = vadd.xlane.f32.xlu0 %v805
    %v807 = vpop.xlane.xlu0 %806
    %v808 = vsel %vm413, %v752, 0.0
    %809 = vadd.xlane.f32.xlu0 %v808
    %v810 = vpop.xlane.xlu0 %809
    %v811 = vsel %vm413, %v753, 0.0
    %812 = vadd.xlane.f32.xlu0 %v811
    %v813 = vpop.xlane.xlu0 %812
    %v814 = vsel %vm413, %v754, 0.0
    %815 = vadd.xlane.f32.xlu0 %v814
    %v816 = vpop.xlane.xlu0 %815
    %v817 = vsel %vm413, %v755, 0.0
    %818 = vadd.xlane.f32.xlu0 %v817
    %v819 = vpop.xlane.xlu0 %818
    %v820 = vsel %vm413, %v756, 0.0
    %821 = vadd.xlane.f32.xlu0 %v820
    %v822 = vpop.xlane.xlu0 %821
    %v823 = vsel %vm413, %v757, 0.0
    %824 = vadd.xlane.f32.xlu0 %v823
    %v825 = vpop.xlane.xlu0 %824
    %v826 = vsel %vm413, %v758, 0.0
    %827 = vadd.xlane.f32.xlu0 %v826
    %v828 = vpop.xlane.xlu0 %827
    %v829 = vsel %vm413, %v759, 0.0
    %830 = vadd.xlane.f32.xlu0 %v829
    %v831 = vpop.xlane.xlu0 %830
    %v832 = vsel %vm413, %v760, 0.0
    %833 = vadd.xlane.f32.xlu0 %v832
    %v834 = vpop.xlane.xlu0 %833
    %v835 = vsel %vm413, %v761, 0.0
    %836 = vadd.xlane.f32.xlu0 %v835
    %v837 = vpop.xlane.xlu0 %836
    %v838 = vsel %vm413, %v762, 0.0
    %839 = vadd.xlane.f32.xlu0 %v838
    %v840 = vpop.xlane.xlu0 %839
    %v841 = vsel %vm413, %v763, 0.0
    %842 = vadd.xlane.f32.xlu0 %v841
    %v843 = vpop.xlane.xlu0 %842
    %v844 = vsel %vm413, %v764, 0.0
    %845 = vadd.xlane.f32.xlu0 %v844
    %v846 = vpop.xlane.xlu0 %845
    %v847 = vsel %vm413, %v765, 0.0
    %848 = vadd.xlane.f32.xlu0 %v847
    %v849 = vpop.xlane.xlu0 %848
    %v850 = vsel %vm413, %v766, 0.0
    %851 = vadd.xlane.f32.xlu0 %v850
    %v852 = vpop.xlane.xlu0 %851
    %v853 = vsel %vm413, %v767, 0.0
    %854 = vadd.xlane.f32.xlu0 %v853
    %v855 = vpop.xlane.xlu0 %854
    %v856 = vsel %vm413, %v768, 0.0
    %857 = vadd.xlane.f32.xlu0 %v856
    %v858 = vpop.xlane.xlu0 %857
    %v859 = vsel %vm413, %v769, 0.0
    %860 = vadd.xlane.f32.xlu0 %v859
    %v861 = vpop.xlane.xlu0 %860
    %v862 = vsel %vm413, %v770, 0.0
    %863 = vadd.xlane.f32.xlu0 %v862
    %v864 = vpop.xlane.xlu0 %863
    %v865 = vsel %vm413, %v771, 0.0
    %866 = vadd.xlane.f32.xlu0 %v865
    %v867 = vpop.xlane.xlu0 %866
    %v868 = vsel %vm413, %v772, 0.0
    %869 = vadd.xlane.f32.xlu0 %v868
    %v870 = vpop.xlane.xlu0 %869
    %v871 = vsel %vm413, %v773, 0.0
    %872 = vadd.xlane.f32.xlu0 %v871
    %v873 = vpop.xlane.xlu0 %872
    %v874 = vsel %vm413, %v774, 0.0
    %875 = vadd.xlane.f32.xlu0 %v874
    %v876 = vpop.xlane.xlu0 %875
    %v877 = vsel %vm413, %v775, 0.0
    %878 = vadd.xlane.f32.xlu0 %v877
    %v879 = vpop.xlane.xlu0 %878
    %v880 = vsel %vm413, %v776, 0.0
    %881 = vadd.xlane.f32.xlu0 %v880
    %v882 = vpop.xlane.xlu0 %881
    %v883 = vsel %vm413, %v777, 0.0
    %884 = vadd.xlane.f32.xlu0 %v883
    %v885 = vpop.xlane.xlu0 %884
    %v886 = vsel %vm413, %v778, 0.0
    %887 = vadd.xlane.f32.xlu0 %v886
    %v888 = vpop.xlane.xlu0 %887
    %v889 = vsel %vm413, %v779, 0.0
    %890 = vadd.xlane.f32.xlu0 %v889
    %v891 = vpop.xlane.xlu0 %890
    %v892 = vsel %vm413, %v780, 0.0
    %893 = vadd.xlane.f32.xlu0 %v892
    %v894 = vpop.xlane.xlu0 %893
    %v895 = vsel %vm413, %v781, 0.0
    %896 = vadd.xlane.f32.xlu0 %v895
    %v897 = vpop.xlane.xlu0 %896
    %v898 = vsel %vm413, %v782, 0.0
    %899 = vadd.xlane.f32.xlu0 %v898
    %v900 = vpop.xlane.xlu0 %899
    %v901 = vsel %vm413, %v783, 0.0
    %902 = vadd.xlane.f32.xlu0 %v901
    %v903 = vpop.xlane.xlu0 %902
    %v904 = vxor.u32 %v786, 2147483648
    %v905 = vxor.u32 %v789, 2147483648
    %v906 = vxor.u32 %v792, 2147483648
    %v907 = vxor.u32 %v795, 2147483648
    %v908 = vxor.u32 %v798, 2147483648
    %v909 = vxor.u32 %v801, 2147483648
    %v910 = vxor.u32 %v804, 2147483648
    %v911 = vxor.u32 %v807, 2147483648
    %v912 = vxor.u32 %v810, 2147483648
    %v913 = vxor.u32 %v813, 2147483648
    %v914 = vxor.u32 %v816, 2147483648
    %v915 = vxor.u32 %v819, 2147483648
    %v916 = vxor.u32 %v822, 2147483648
    %v917 = vxor.u32 %v825, 2147483648
    %v918 = vxor.u32 %v828, 2147483648
    %v919 = vxor.u32 %v831, 2147483648
    %v920 = vxor.u32 %v834, 2147483648
    %v921 = vxor.u32 %v837, 2147483648
    %v922 = vxor.u32 %v840, 2147483648
    %v923 = vxor.u32 %v843, 2147483648
    %v924 = vxor.u32 %v846, 2147483648
    %v925 = vxor.u32 %v849, 2147483648
    %v926 = vxor.u32 %v852, 2147483648
    %v927 = vxor.u32 %v855, 2147483648
    %v928 = vxor.u32 %v858, 2147483648
    %v929 = vxor.u32 %v861, 2147483648
    %v930 = vxor.u32 %v864, 2147483648
    %v931 = vxor.u32 %v867, 2147483648
    %v932 = vxor.u32 %v870, 2147483648
    %v933 = vxor.u32 %v873, 2147483648
    %v934 = vxor.u32 %v876, 2147483648
    %v935 = vxor.u32 %v879, 2147483648
    %v936 = vxor.u32 %v882, 2147483648
    %v937 = vxor.u32 %v885, 2147483648
    %v938 = vxor.u32 %v888, 2147483648
    %v939 = vxor.u32 %v891, 2147483648
    %v940 = vxor.u32 %v894, 2147483648
    %v941 = vxor.u32 %v897, 2147483648
    %v942 = vxor.u32 %v900, 2147483648
    %v943 = vxor.u32 %v903, 2147483648
    %v944 = vmul.f32 %v904, 1.442695
    %v945 = vpow.pop %v944
    %v946 = vmul.f32 %v905, 1.442695
    %v947 = vpow.pop %v946
    %v948 = vmul.f32 %v906, 1.442695
    %v949 = vpow.pop %v948
    %v950 = vmul.f32 %v907, 1.442695
    %v951 = vpow.pop %v950
    %v952 = vmul.f32 %v908, 1.442695
    %v953 = vpow.pop %v952
    %v954 = vmul.f32 %v909, 1.442695
    %v955 = vpow.pop %v954
    %v956 = vmul.f32 %v910, 1.442695
    %v957 = vpow.pop %v956
    %v958 = vmul.f32 %v911, 1.442695
    %v959 = vpow.pop %v958
    %v960 = vmul.f32 %v912, 1.442695
    %v961 = vpow.pop %v960
    %v962 = vmul.f32 %v913, 1.442695
    %v963 = vpow.pop %v962
    %v964 = vmul.f32 %v914, 1.442695
    %v965 = vpow.pop %v964
    %v966 = vmul.f32 %v915, 1.442695
    %v967 = vpow.pop %v966
    %v968 = vmul.f32 %v916, 1.442695
    %v969 = vpow.pop %v968
    %v970 = vmul.f32 %v917, 1.442695
    %v971 = vpow.pop %v970
    %v972 = vmul.f32 %v918, 1.442695
    %v973 = vpow.pop %v972
    %v974 = vmul.f32 %v919, 1.442695
    %v975 = vpow.pop %v974
    %v976 = vmul.f32 %v920, 1.442695
    %v977 = vpow.pop %v976
    %v978 = vmul.f32 %v921, 1.442695
    %v979 = vpow.pop %v978
    %v980 = vmul.f32 %v922, 1.442695
    %v981 = vpow.pop %v980
    %v982 = vmul.f32 %v923, 1.442695
    %v983 = vpow.pop %v982
    %v984 = vmul.f32 %v924, 1.442695
    %v985 = vpow.pop %v984
    %v986 = vmul.f32 %v925, 1.442695
    %v987 = vpow.pop %v986
    %v988 = vmul.f32 %v926, 1.442695
    %v989 = vpow.pop %v988
    %v990 = vmul.f32 %v927, 1.442695
    %v991 = vpow.pop %v990
    %v992 = vmul.f32 %v928, 1.442695
    %v993 = vpow.pop %v992
    %v994 = vmul.f32 %v929, 1.442695
    %v995 = vpow.pop %v994
    %v996 = vmul.f32 %v930, 1.442695
    %v997 = vpow.pop %v996
    %v998 = vmul.f32 %v931, 1.442695
    %v999 = vpow.pop %v998
    %v1000 = vmul.f32 %v932, 1.442695
    %v1001 = vpow.pop %v1000
    %v1002 = vmul.f32 %v933, 1.442695
    %v1003 = vpow.pop %v1002
    %v1004 = vmul.f32 %v934, 1.442695
    %v1005 = vpow.pop %v1004
    %v1006 = vmul.f32 %v935, 1.442695
    %v1007 = vpow.pop %v1006
    %v1008 = vmul.f32 %v936, 1.442695
    %v1009 = vpow.pop %v1008
    %v1010 = vmul.f32 %v937, 1.442695
    %v1011 = vpow.pop %v1010
    %v1012 = vmul.f32 %v938, 1.442695
    %v1013 = vpow.pop %v1012
    %v1014 = vmul.f32 %v939, 1.442695
    %v1015 = vpow.pop %v1014
    %v1016 = vmul.f32 %v940, 1.442695
    %v1017 = vpow.pop %v1016
    %v1018 = vmul.f32 %v941, 1.442695
    %v1019 = vpow.pop %v1018
    %v1020 = vmul.f32 %v942, 1.442695
    %v1021 = vpow.pop %v1020
    %v1022 = vmul.f32 %v943, 1.442695
    %v1023 = vpow.pop %v1022
    %v1024 = vadd.f32 %v945, 1.0
    %v1025 = vadd.f32 %v947, 1.0
    %v1026 = vadd.f32 %v949, 1.0
    %v1027 = vadd.f32 %v951, 1.0
    %v1028 = vadd.f32 %v953, 1.0
    %v1029 = vadd.f32 %v955, 1.0
    %v1030 = vadd.f32 %v957, 1.0
    %v1031 = vadd.f32 %v959, 1.0
    %v1032 = vadd.f32 %v961, 1.0
    %v1033 = vadd.f32 %v963, 1.0
    %v1034 = vadd.f32 %v965, 1.0
    %v1035 = vadd.f32 %v967, 1.0
    %v1036 = vadd.f32 %v969, 1.0
    %v1037 = vadd.f32 %v971, 1.0
    %v1038 = vadd.f32 %v973, 1.0
    %v1039 = vadd.f32 %v975, 1.0
    %v1040 = vadd.f32 %v977, 1.0
    %v1041 = vadd.f32 %v979, 1.0
    %v1042 = vadd.f32 %v981, 1.0
    %v1043 = vadd.f32 %v983, 1.0
    %v1044 = vadd.f32 %v985, 1.0
    %v1045 = vadd.f32 %v987, 1.0
    %v1046 = vadd.f32 %v989, 1.0
    %v1047 = vadd.f32 %v991, 1.0
    %v1048 = vadd.f32 %v993, 1.0
    %v1049 = vadd.f32 %v995, 1.0
    %v1050 = vadd.f32 %v997, 1.0
    %v1051 = vadd.f32 %v999, 1.0
    %v1052 = vadd.f32 %v1001, 1.0
    %v1053 = vadd.f32 %v1003, 1.0
    %v1054 = vadd.f32 %v1005, 1.0
    %v1055 = vadd.f32 %v1007, 1.0
    %v1056 = vadd.f32 %v1009, 1.0
    %v1057 = vadd.f32 %v1011, 1.0
    %v1058 = vadd.f32 %v1013, 1.0
    %v1059 = vadd.f32 %v1015, 1.0
    %v1060 = vadd.f32 %v1017, 1.0
    %v1061 = vadd.f32 %v1019, 1.0
    %v1062 = vadd.f32 %v1021, 1.0
    %v1063 = vadd.f32 %v1023, 1.0
    %v1064 = vrcp.pop %v1024
    %v1065 = vmul.f32 1.0, %v1064
    %v1066 = vrcp.pop %v1025
    %v1067 = vmul.f32 1.0, %v1066
    %v1068 = vrcp.pop %v1026
    %v1069 = vmul.f32 1.0, %v1068
    %v1070 = vrcp.pop %v1027
    %v1071 = vmul.f32 1.0, %v1070
    %v1072 = vrcp.pop %v1028
    %v1073 = vmul.f32 1.0, %v1072
    %v1074 = vrcp.pop %v1029
    %v1075 = vmul.f32 1.0, %v1074
    %v1076 = vrcp.pop %v1030
    %v1077 = vmul.f32 1.0, %v1076
    %v1078 = vrcp.pop %v1031
    %v1079 = vmul.f32 1.0, %v1078
    %v1080 = vrcp.pop %v1032
    %v1081 = vmul.f32 1.0, %v1080
    %v1082 = vrcp.pop %v1033
    %v1083 = vmul.f32 1.0, %v1082
    %v1084 = vrcp.pop %v1034
    %v1085 = vmul.f32 1.0, %v1084
    %v1086 = vrcp.pop %v1035
    %v1087 = vmul.f32 1.0, %v1086
    %v1088 = vrcp.pop %v1036
    %v1089 = vmul.f32 1.0, %v1088
    %v1090 = vrcp.pop %v1037
    %v1091 = vmul.f32 1.0, %v1090
    %v1092 = vrcp.pop %v1038
    %v1093 = vmul.f32 1.0, %v1092
    %v1094 = vrcp.pop %v1039
    %v1095 = vmul.f32 1.0, %v1094
    %v1096 = vrcp.pop %v1040
    %v1097 = vmul.f32 1.0, %v1096
    %v1098 = vrcp.pop %v1041
    %v1099 = vmul.f32 1.0, %v1098
    %v1100 = vrcp.pop %v1042
    %v1101 = vmul.f32 1.0, %v1100
    %v1102 = vrcp.pop %v1043
    %v1103 = vmul.f32 1.0, %v1102
    %v1104 = vrcp.pop %v1044
    %v1105 = vmul.f32 1.0, %v1104
    %v1106 = vrcp.pop %v1045
    %v1107 = vmul.f32 1.0, %v1106
    %v1108 = vrcp.pop %v1046
    %v1109 = vmul.f32 1.0, %v1108
    %v1110 = vrcp.pop %v1047
    %v1111 = vmul.f32 1.0, %v1110
    %v1112 = vrcp.pop %v1048
    %v1113 = vmul.f32 1.0, %v1112
    %v1114 = vrcp.pop %v1049
    %v1115 = vmul.f32 1.0, %v1114
    %v1116 = vrcp.pop %v1050
    %v1117 = vmul.f32 1.0, %v1116
    %v1118 = vrcp.pop %v1051
    %v1119 = vmul.f32 1.0, %v1118
    %v1120 = vrcp.pop %v1052
    %v1121 = vmul.f32 1.0, %v1120
    %v1122 = vrcp.pop %v1053
    %v1123 = vmul.f32 1.0, %v1122
    %v1124 = vrcp.pop %v1054
    %v1125 = vmul.f32 1.0, %v1124
    %v1126 = vrcp.pop %v1055
    %v1127 = vmul.f32 1.0, %v1126
    %v1128 = vrcp.pop %v1056
    %v1129 = vmul.f32 1.0, %v1128
    %v1130 = vrcp.pop %v1057
    %v1131 = vmul.f32 1.0, %v1130
    %v1132 = vrcp.pop %v1058
    %v1133 = vmul.f32 1.0, %v1132
    %v1134 = vrcp.pop %v1059
    %v1135 = vmul.f32 1.0, %v1134
    %v1136 = vrcp.pop %v1060
    %v1137 = vmul.f32 1.0, %v1136
    %v1138 = vrcp.pop %v1061
    %v1139 = vmul.f32 1.0, %v1138
    %v1140 = vrcp.pop %v1062
    %v1141 = vmul.f32 1.0, %v1140
    %v1142 = vrcp.pop %v1063
    %v1143 = vmul.f32 1.0, %v1142
    %v1144 = vadd.f32 %v84, %v87
    %v1145 = vadd.f32 %v1144, %v90
    %v1146 = vadd.f32 %v1145, %v93
    %v1147 = vrot.slane %v1146, 4
    %v1148 = vadd.f32 %v1146, %v1147
    %v1149 = vrot.slane %v1148, 2
    %v1150 = vadd.f32 %v1148, %v1149
    %v1151 = vrot.slane %v1150, 1
    %v1152 = vadd.f32 %v1150, %v1151
    %v1153 = vadd.f32 %v96, %v99
    %v1154 = vadd.f32 %v1153, %v102
    %v1155 = vadd.f32 %v1154, %v105
    %v1156 = vrot.slane %v1155, 4
    %v1157 = vadd.f32 %v1155, %v1156
    %v1158 = vrot.slane %v1157, 2
    %v1159 = vadd.f32 %v1157, %v1158
    %v1160 = vrot.slane %v1159, 1
    %v1161 = vadd.f32 %v1159, %v1160
    %v1162 = vadd.f32 %v108, %v111
    %v1163 = vadd.f32 %v1162, %v114
    %v1164 = vadd.f32 %v1163, %v117
    %v1165 = vrot.slane %v1164, 4
    %v1166 = vadd.f32 %v1164, %v1165
    %v1167 = vrot.slane %v1166, 2
    %v1168 = vadd.f32 %v1166, %v1167
    %v1169 = vrot.slane %v1168, 1
    %v1170 = vadd.f32 %v1168, %v1169
    %v1171 = vadd.f32 %v120, %v123
    %v1172 = vadd.f32 %v1171, %v126
    %v1173 = vadd.f32 %v1172, %v129
    %v1174 = vrot.slane %v1173, 4
    %v1175 = vadd.f32 %v1173, %v1174
    %v1176 = vrot.slane %v1175, 2
    %v1177 = vadd.f32 %v1175, %v1176
    %v1178 = vrot.slane %v1177, 1
    %v1179 = vadd.f32 %v1177, %v1178
    %v1180 = vadd.f32 %v132, %v135
    %v1181 = vadd.f32 %v1180, %v138
    %v1182 = vadd.f32 %v1181, %v141
    %v1183 = vrot.slane %v1182, 4
    %v1184 = vadd.f32 %v1182, %v1183
    %v1185 = vrot.slane %v1184, 2
    %v1186 = vadd.f32 %v1184, %v1185
    %v1187 = vrot.slane %v1186, 1
    %v1188 = vadd.f32 %v1186, %v1187
    %v1189 = vadd.f32 %v144, %v147
    %v1190 = vadd.f32 %v1189, %v150
    %v1191 = vadd.f32 %v1190, %v153
    %v1192 = vrot.slane %v1191, 4
    %v1193 = vadd.f32 %v1191, %v1192
    %v1194 = vrot.slane %v1193, 2
    %v1195 = vadd.f32 %v1193, %v1194
    %v1196 = vrot.slane %v1195, 1
    %v1197 = vadd.f32 %v1195, %v1196
    %v1198 = vadd.f32 %v156, %v159
    %v1199 = vadd.f32 %v1198, %v162
    %v1200 = vadd.f32 %v1199, %v165
    %v1201 = vrot.slane %v1200, 4
    %v1202 = vadd.f32 %v1200, %v1201
    %v1203 = vrot.slane %v1202, 2
    %v1204 = vadd.f32 %v1202, %v1203
    %v1205 = vrot.slane %v1204, 1
    %v1206 = vadd.f32 %v1204, %v1205
    %v1207 = vadd.f32 %v168, %v171
    %v1208 = vadd.f32 %v1207, %v174
    %v1209 = vadd.f32 %v1208, %v177
    %v1210 = vrot.slane %v1209, 4
    %v1211 = vadd.f32 %v1209, %v1210
    %v1212 = vrot.slane %v1211, 2
    %v1213 = vadd.f32 %v1211, %v1212
    %v1214 = vrot.slane %v1213, 1
    %v1215 = vadd.f32 %v1213, %v1214
    %v1216 = vadd.f32 %v180, %v183
    %v1217 = vadd.f32 %v1216, %v186
    %v1218 = vadd.f32 %v1217, %v189
    %v1219 = vrot.slane %v1218, 4
    %v1220 = vadd.f32 %v1218, %v1219
    %v1221 = vrot.slane %v1220, 2
    %v1222 = vadd.f32 %v1220, %v1221
    %v1223 = vrot.slane %v1222, 1
    %v1224 = vadd.f32 %v1222, %v1223
    %v1225 = vadd.f32 %v192, %v195
    %v1226 = vadd.f32 %v1225, %v198
    %v1227 = vadd.f32 %v1226, %v201
    %v1228 = vrot.slane %v1227, 4
    %v1229 = vadd.f32 %v1227, %v1228
    %v1230 = vrot.slane %v1229, 2
    %v1231 = vadd.f32 %v1229, %v1230
    %v1232 = vrot.slane %v1231, 1
    %v1233 = vadd.f32 %v1231, %v1232
    %v1234 = vrcp.pop 32.0
    %v1235 = vmul.f32 %v1152, %v1234
    %v1236 = vmul.f32 %v1161, %v1234
    %v1237 = vmul.f32 %v1170, %v1234
    %v1238 = vmul.f32 %v1179, %v1234
    %v1239 = vmul.f32 %v1188, %v1234
    %v1240 = vmul.f32 %v1197, %v1234
    %v1241 = vmul.f32 %v1206, %v1234
    %v1242 = vmul.f32 %v1215, %v1234
    %v1243 = vmul.f32 %v1224, %v1234
    %v1244 = vmul.f32 %v1233, %v1234
    %v1245 = vmax.f32 %v245, %v248
    %v1246 = vmax.f32 %v1245, %v251
    %v1247 = vmax.f32 %v1246, %v254
    %v1248 = vrot.slane %v1247, 4
    %v1249 = vmax.f32 %v1247, %v1248
    %v1250 = vrot.slane %v1249, 2
    %v1251 = vmax.f32 %v1249, %v1250
    %v1252 = vrot.slane %v1251, 1
    %v1253 = vmax.f32 %v1251, %v1252
    %v1254 = vmax.f32 %v257, %v260
    %v1255 = vmax.f32 %v1254, %v263
    %v1256 = vmax.f32 %v1255, %v266
    %v1257 = vrot.slane %v1256, 4
    %v1258 = vmax.f32 %v1256, %v1257
    %v1259 = vrot.slane %v1258, 2
    %v1260 = vmax.f32 %v1258, %v1259
    %v1261 = vrot.slane %v1260, 1
    %v1262 = vmax.f32 %v1260, %v1261
    %v1263 = vmax.f32 %v269, %v272
    %v1264 = vmax.f32 %v1263, %v275
    %v1265 = vmax.f32 %v1264, %v278
    %v1266 = vrot.slane %v1265, 4
    %v1267 = vmax.f32 %v1265, %v1266
    %v1268 = vrot.slane %v1267, 2
    %v1269 = vmax.f32 %v1267, %v1268
    %v1270 = vrot.slane %v1269, 1
    %v1271 = vmax.f32 %v1269, %v1270
    %v1272 = vmax.f32 %v281, %v284
    %v1273 = vmax.f32 %v1272, %v287
    %v1274 = vmax.f32 %v1273, %v290
    %v1275 = vrot.slane %v1274, 4
    %v1276 = vmax.f32 %v1274, %v1275
    %v1277 = vrot.slane %v1276, 2
    %v1278 = vmax.f32 %v1276, %v1277
    %v1279 = vrot.slane %v1278, 1
    %v1280 = vmax.f32 %v1278, %v1279
    %v1281 = vmax.f32 %v293, %v296
    %v1282 = vmax.f32 %v1281, %v299
    %v1283 = vmax.f32 %v1282, %v302
    %v1284 = vrot.slane %v1283, 4
    %v1285 = vmax.f32 %v1283, %v1284
    %v1286 = vrot.slane %v1285, 2
    %v1287 = vmax.f32 %v1285, %v1286
    %v1288 = vrot.slane %v1287, 1
    %v1289 = vmax.f32 %v1287, %v1288
    %v1290 = vmax.f32 %v305, %v308
    %v1291 = vmax.f32 %v1290, %v311
    %v1292 = vmax.f32 %v1291, %v314
    %v1293 = vrot.slane %v1292, 4
    %v1294 = vmax.f32 %v1292, %v1293
    %v1295 = vrot.slane %v1294, 2
    %v1296 = vmax.f32 %v1294, %v1295
    %v1297 = vrot.slane %v1296, 1
    %v1298 = vmax.f32 %v1296, %v1297
    %v1299 = vmax.f32 %v317, %v320
    %v1300 = vmax.f32 %v1299, %v323
    %v1301 = vmax.f32 %v1300, %v326
    %v1302 = vrot.slane %v1301, 4
    %v1303 = vmax.f32 %v1301, %v1302
    %v1304 = vrot.slane %v1303, 2
    %v1305 = vmax.f32 %v1303, %v1304
    %v1306 = vrot.slane %v1305, 1
    %v1307 = vmax.f32 %v1305, %v1306
    %v1308 = vmax.f32 %v329, %v332
    %v1309 = vmax.f32 %v1308, %v335
    %v1310 = vmax.f32 %v1309, %v338
    %v1311 = vrot.slane %v1310, 4
    %v1312 = vmax.f32 %v1310, %v1311
    %v1313 = vrot.slane %v1312, 2
    %v1314 = vmax.f32 %v1312, %v1313
    %v1315 = vrot.slane %v1314, 1
    %v1316 = vmax.f32 %v1314, %v1315
    %v1317 = vmax.f32 %v341, %v344
    %v1318 = vmax.f32 %v1317, %v347
    %v1319 = vmax.f32 %v1318, %v350
    %v1320 = vrot.slane %v1319, 4
    %v1321 = vmax.f32 %v1319, %v1320
    %v1322 = vrot.slane %v1321, 2
    %v1323 = vmax.f32 %v1321, %v1322
    %v1324 = vrot.slane %v1323, 1
    %v1325 = vmax.f32 %v1323, %v1324
    %v1326 = vmax.f32 %v353, %v356
    %v1327 = vmax.f32 %v1326, %v359
    %v1328 = vmax.f32 %v1327, %v362
    %v1329 = vrot.slane %v1328, 4
    %v1330 = vmax.f32 %v1328, %v1329
    %v1331 = vrot.slane %v1330, 2
    %v1332 = vmax.f32 %v1330, %v1331
    %v1333 = vrot.slane %v1332, 1
    %v1334 = vmax.f32 %v1332, %v1333
    %v1335 = vld [vmem:[%s3] sm:$0x1]
    %v1336 = vmul.f32 %v1235, %v1335
    %v1337 = vmul.f32 %v1236, %v1335
    %v1338 = vmul.f32 %v1237, %v1335
    %v1339 = vmul.f32 %v1238, %v1335
    %v1340 = vmul.f32 %v1239, %v1335
    %v1341 = vmul.f32 %v1240, %v1335
    %v1342 = vmul.f32 %v1241, %v1335
    %v1343 = vmul.f32 %v1242, %v1335
    %v1344 = vmul.f32 %v1243, %v1335
    %v1345 = vmul.f32 %v1244, %v1335
    %vm1346 = vcmask 393216
    %v1347 = vsel %vm1346, %v1336, 0.0
    %1348 = vadd.xlane.f32.xlu0 %v1347
    %v1349 = vpop.xlane.xlu0 %1348
    %v1350 = vsel %vm1346, %v1337, 0.0
    %1351 = vadd.xlane.f32.xlu0 %v1350
    %v1352 = vpop.xlane.xlu0 %1351
    %v1353 = vsel %vm1346, %v1338, 0.0
    %1354 = vadd.xlane.f32.xlu0 %v1353
    %v1355 = vpop.xlane.xlu0 %1354
    %v1356 = vsel %vm1346, %v1339, 0.0
    %1357 = vadd.xlane.f32.xlu0 %v1356
    %v1358 = vpop.xlane.xlu0 %1357
    %v1359 = vsel %vm1346, %v1340, 0.0
    %1360 = vadd.xlane.f32.xlu0 %v1359
    %v1361 = vpop.xlane.xlu0 %1360
    %v1362 = vsel %vm1346, %v1341, 0.0
    %1363 = vadd.xlane.f32.xlu0 %v1362
    %v1364 = vpop.xlane.xlu0 %1363
    %v1365 = vsel %vm1346, %v1342, 0.0
    %1366 = vadd.xlane.f32.xlu0 %v1365
    %v1367 = vpop.xlane.xlu0 %1366
    %v1368 = vsel %vm1346, %v1343, 0.0
    %1369 = vadd.xlane.f32.xlu0 %v1368
    %v1370 = vpop.xlane.xlu0 %1369
    %v1371 = vsel %vm1346, %v1344, 0.0
    %1372 = vadd.xlane.f32.xlu0 %v1371
    %v1373 = vpop.xlane.xlu0 %1372
    %v1374 = vsel %vm1346, %v1345, 0.0
    %1375 = vadd.xlane.f32.xlu0 %v1374
    %v1376 = vpop.xlane.xlu0 %1375
    %v1377 = vld [vmem:[%s4] sm:$0x1]
    %v1378 = vmul.f32 %v1253, %v1377
    %v1379 = vmul.f32 %v1262, %v1377
    %v1380 = vmul.f32 %v1271, %v1377
    %v1381 = vmul.f32 %v1280, %v1377
    %v1382 = vmul.f32 %v1289, %v1377
    %v1383 = vmul.f32 %v1298, %v1377
    %v1384 = vmul.f32 %v1307, %v1377
    %v1385 = vmul.f32 %v1316, %v1377
    %v1386 = vmul.f32 %v1325, %v1377
    %v1387 = vmul.f32 %v1334, %v1377
    %v1388 = vsel %vm1346, %v1378, 0.0
    %1389 = vadd.xlane.f32.xlu0 %v1388
    %v1390 = vpop.xlane.xlu0 %1389
    %v1391 = vsel %vm1346, %v1379, 0.0
    %1392 = vadd.xlane.f32.xlu0 %v1391
    %v1393 = vpop.xlane.xlu0 %1392
    %v1394 = vsel %vm1346, %v1380, 0.0
    %1395 = vadd.xlane.f32.xlu0 %v1394
    %v1396 = vpop.xlane.xlu0 %1395
    %v1397 = vsel %vm1346, %v1381, 0.0
    %1398 = vadd.xlane.f32.xlu0 %v1397
    %v1399 = vpop.xlane.xlu0 %1398
    %v1400 = vsel %vm1346, %v1382, 0.0
    %1401 = vadd.xlane.f32.xlu0 %v1400
    %v1402 = vpop.xlane.xlu0 %1401
    %v1403 = vsel %vm1346, %v1383, 0.0
    %1404 = vadd.xlane.f32.xlu0 %v1403
    %v1405 = vpop.xlane.xlu0 %1404
    %v1406 = vsel %vm1346, %v1384, 0.0
    %1407 = vadd.xlane.f32.xlu0 %v1406
    %v1408 = vpop.xlane.xlu0 %1407
    %v1409 = vsel %vm1346, %v1385, 0.0
    %1410 = vadd.xlane.f32.xlu0 %v1409
    %v1411 = vpop.xlane.xlu0 %1410
    %v1412 = vsel %vm1346, %v1386, 0.0
    %1413 = vadd.xlane.f32.xlu0 %v1412
    %v1414 = vpop.xlane.xlu0 %1413
    %v1415 = vsel %vm1346, %v1387, 0.0
    %1416 = vadd.xlane.f32.xlu0 %v1415
    %v1417 = vpop.xlane.xlu0 %1416
    %v1418 = vadd.f32 %v1349, %v1390
    %v1419 = vadd.f32 %v1352, %v1393
    %v1420 = vadd.f32 %v1355, %v1396
    %v1421 = vadd.f32 %v1358, %v1399
    %v1422 = vadd.f32 %v1361, %v1402
    %v1423 = vadd.f32 %v1364, %v1405
    %v1424 = vadd.f32 %v1367, %v1408
    %v1425 = vadd.f32 %v1370, %v1411
    %v1426 = vadd.f32 %v1373, %v1414
    %v1427 = vadd.f32 %v1376, %v1417
    %v1428 = vld [vmem:[#allocation2] sm:$0x1]
    %v1429 = vadd.f32 %v1418, %v1428
    %v1430 = vadd.f32 %v1419, %v1428
    %v1431 = vadd.f32 %v1420, %v1428
    %v1432 = vadd.f32 %v1421, %v1428
    %v1433 = vadd.f32 %v1422, %v1428
    %v1434 = vadd.f32 %v1423, %v1428
    %v1435 = vadd.f32 %v1424, %v1428
    %v1436 = vadd.f32 %v1425, %v1428
    %v1437 = vadd.f32 %v1426, %v1428
    %v1438 = vadd.f32 %v1427, %v1428
    %v1439 = vxor.u32 %v1429, 2147483648
    %v1440 = vxor.u32 %v1430, 2147483648
    %v1441 = vxor.u32 %v1431, 2147483648
    %v1442 = vxor.u32 %v1432, 2147483648
    %v1443 = vxor.u32 %v1433, 2147483648
    %v1444 = vxor.u32 %v1434, 2147483648
    %v1445 = vxor.u32 %v1435, 2147483648
    %v1446 = vxor.u32 %v1436, 2147483648
    %v1447 = vxor.u32 %v1437, 2147483648
    %v1448 = vxor.u32 %v1438, 2147483648
    %v1449 = vmul.f32 %v1439, 1.442695
    %v1450 = vpow.pop %v1449
    %v1451 = vmul.f32 %v1440, 1.442695
    %v1452 = vpow.pop %v1451
    %v1453 = vmul.f32 %v1441, 1.442695
    %v1454 = vpow.pop %v1453
    %v1455 = vmul.f32 %v1442, 1.442695
    %v1456 = vpow.pop %v1455
    %v1457 = vmul.f32 %v1443, 1.442695
    %v1458 = vpow.pop %v1457
    %v1459 = vmul.f32 %v1444, 1.442695
    %v1460 = vpow.pop %v1459
    %v1461 = vmul.f32 %v1445, 1.442695
    %v1462 = vpow.pop %v1461
    %v1463 = vmul.f32 %v1446, 1.442695
    %v1464 = vpow.pop %v1463
    %v1465 = vmul.f32 %v1447, 1.442695
    %v1466 = vpow.pop %v1465
    %v1467 = vmul.f32 %v1448, 1.442695
    %v1468 = vpow.pop %v1467
    %v1469 = vadd.f32 %v1450, 1.0
    %v1470 = vadd.f32 %v1452, 1.0
    %v1471 = vadd.f32 %v1454, 1.0
    %v1472 = vadd.f32 %v1456, 1.0
    %v1473 = vadd.f32 %v1458, 1.0
    %v1474 = vadd.f32 %v1460, 1.0
    %v1475 = vadd.f32 %v1462, 1.0
    %v1476 = vadd.f32 %v1464, 1.0
    %v1477 = vadd.f32 %v1466, 1.0
    %v1478 = vadd.f32 %v1468, 1.0
    %v1479 = vrcp.pop %v1469
    %v1480 = vmul.f32 1.0, %v1479
    %v1481 = vrcp.pop %v1470
    %v1482 = vmul.f32 1.0, %v1481
    %v1483 = vrcp.pop %v1471
    %v1484 = vmul.f32 1.0, %v1483
    %v1485 = vrcp.pop %v1472
    %v1486 = vmul.f32 1.0, %v1485
    %v1487 = vrcp.pop %v1473
    %v1488 = vmul.f32 1.0, %v1487
    %v1489 = vrcp.pop %v1474
    %v1490 = vmul.f32 1.0, %v1489
    %v1491 = vrcp.pop %v1475
    %v1492 = vmul.f32 1.0, %v1491
    %v1493 = vrcp.pop %v1476
    %v1494 = vmul.f32 1.0, %v1493
    %v1495 = vrcp.pop %v1477
    %v1496 = vmul.f32 1.0, %v1495
    %v1497 = vrcp.pop %v1478
    %v1498 = vmul.f32 1.0, %v1497
    %vm1499 = vcmask 1040384
    %v1500 = vsel %vm1499, %v1235, %v1253
    %v1501 = vsel %vm1499, %v1236, %v1262
    %v1502 = vsel %vm1499, %v1237, %v1271
    %v1503 = vsel %vm1499, %v1238, %v1280
    %v1504 = vsel %vm1499, %v1239, %v1289
    %v1505 = vsel %vm1499, %v1240, %v1298
    %v1506 = vsel %vm1499, %v1241, %v1307
    %v1507 = vsel %vm1499, %v1242, %v1316
    %v1508 = vsel %vm1499, %v1243, %v1325
    %v1509 = vsel %vm1499, %v1244, %v1334
    %1520 = vrot.lane.b32.xlu0 %v1500, 8
    %v1521 = vpop.permute.xlu0 %1520
    %1522 = vrot.lane.b32.xlu0 %v1501, 8
    %v1523 = vpop.permute.xlu0 %1522
    %1524 = vrot.lane.b32.xlu0 %v1502, 8
    %v1525 = vpop.permute.xlu0 %1524
    %1526 = vrot.lane.b32.xlu0 %v1503, 8
    %v1527 = vpop.permute.xlu0 %1526
    %1528 = vrot.lane.b32.xlu0 %v1504, 8
    %v1529 = vpop.permute.xlu0 %1528
    %1530 = vrot.lane.b32.xlu0 %v1505, 8
    %v1531 = vpop.permute.xlu0 %1530
    %1532 = vrot.lane.b32.xlu0 %v1506, 8
    %v1533 = vpop.permute.xlu0 %1532
    %1534 = vrot.lane.b32.xlu0 %v1507, 8
    %v1535 = vpop.permute.xlu0 %1534
    %1536 = vrot.lane.b32.xlu0 %v1508, 8
    %v1537 = vpop.permute.xlu0 %1536
    %1538 = vrot.lane.b32.xlu0 %v1509, 8
    %v1539 = vpop.permute.xlu0 %1538
    %vm1550 = vcmask 64512
    %v1551 = vsel %vm1550, 0.0, %v1521
    %v1552 = vsel %vm1550, 0.0, %v1523
    %v1553 = vsel %vm1550, 0.0, %v1525
    %v1554 = vsel %vm1550, 0.0, %v1527
    %v1555 = vsel %vm1550, 0.0, %v1529
    %v1556 = vsel %vm1550, 0.0, %v1531
    %v1557 = vsel %vm1550, 0.0, %v1533
    %v1558 = vsel %vm1550, 0.0, %v1535
    %v1559 = vsel %vm1550, 0.0, %v1537
    %v1560 = vsel %vm1550, 0.0, %v1539
    %vm1561 = vcmask 465920
    %v1562 = vsel %vm1561, %v1551, 0.0
    %v1563 = vsel %vm1561, %v1552, 0.0
    %v1564 = vsel %vm1561, %v1553, 0.0
    %v1565 = vsel %vm1561, %v1554, 0.0
    %v1566 = vsel %vm1561, %v1555, 0.0
    %v1567 = vsel %vm1561, %v1556, 0.0
    %v1568 = vsel %vm1561, %v1557, 0.0
    %v1569 = vsel %vm1561, %v1558, 0.0
    %v1570 = vsel %vm1561, %v1559, 0.0
    %v1571 = vsel %vm1561, %v1560, 0.0
    %v1572 = vld [vmem:[%s6] sm:$0xff]
    %v1573 = vmul.f32 %v1562, %v1572
    %v1574 = vmul.f32 %v1563, %v1572
    %v1575 = vmul.f32 %v1564, %v1572
    %v1576 = vmul.f32 %v1565, %v1572
    %v1577 = vmul.f32 %v1566, %v1572
    %v1578 = vmul.f32 %v1567, %v1572
    %v1579 = vmul.f32 %v1568, %v1572
    %v1580 = vmul.f32 %v1569, %v1572
    %v1581 = vmul.f32 %v1570, %v1572
    %v1582 = vmul.f32 %v1571, %v1572
    %v1583 = vadd.f32 %v1573, 0.0
    %v1584 = vadd.f32 %v1574, 0.0
    %v1585 = vadd.f32 %v1575, 0.0
    %v1586 = vadd.f32 %v1576, 0.0
    %v1587 = vadd.f32 %v1577, 0.0
    %v1588 = vadd.f32 %v1578, 0.0
    %v1589 = vadd.f32 %v1579, 0.0
    %v1590 = vadd.f32 %v1580, 0.0
    %v1591 = vadd.f32 %v1581, 0.0
    %v1592 = vadd.f32 %v1582, 0.0
    %v1595 = vunpack.c.l.s4 1983009808
    %v1596 = vunpack.c.0.s8 %v1595
    %v1597 = vlaneseq
    %v1598 = vshrl.u32 %v1597, 7
    %v1599 = vsub.s32 %v1596, %v1598
    %v1600 = vrot.slane %v1572, %v1599
    %1601 = vrot.lane.b32.xlu0 %v1600, 80
    %v1602 = vpop.permute.xlu0 %1601
    %v1604 = vmul.f32 %v1562, %v1602
    %v1605 = vmul.f32 %v1563, %v1602
    %v1606 = vmul.f32 %v1564, %v1602
    %v1607 = vmul.f32 %v1565, %v1602
    %v1608 = vmul.f32 %v1566, %v1602
    %v1609 = vmul.f32 %v1567, %v1602
    %v1610 = vmul.f32 %v1568, %v1602
    %v1611 = vmul.f32 %v1569, %v1602
    %v1612 = vmul.f32 %v1570, %v1602
    %v1613 = vmul.f32 %v1571, %v1602
    %1624 = vrot.lane.b32.xlu0 %v1604, 127
    %v1625 = vpop.permute.xlu0 %1624
    %1626 = vrot.lane.b32.xlu0 %v1605, 127
    %v1627 = vpop.permute.xlu0 %1626
    %1628 = vrot.lane.b32.xlu0 %v1606, 127
    %v1629 = vpop.permute.xlu0 %1628
    %1630 = vrot.lane.b32.xlu0 %v1607, 127
    %v1631 = vpop.permute.xlu0 %1630
    %1632 = vrot.lane.b32.xlu0 %v1608, 127
    %v1633 = vpop.permute.xlu0 %1632
    %1634 = vrot.lane.b32.xlu0 %v1609, 127
    %v1635 = vpop.permute.xlu0 %1634
    %1636 = vrot.lane.b32.xlu0 %v1610, 127
    %v1637 = vpop.permute.xlu0 %1636
    %1638 = vrot.lane.b32.xlu0 %v1611, 127
    %v1639 = vpop.permute.xlu0 %1638
    %1640 = vrot.lane.b32.xlu0 %v1612, 127
    %v1641 = vpop.permute.xlu0 %1640
    %1642 = vrot.lane.b32.xlu0 %v1613, 127
    %v1643 = vpop.permute.xlu0 %1642
    %v1654 = vadd.f32 %v1583, %v1625
    %v1655 = vadd.f32 %v1584, %v1627
    %v1656 = vadd.f32 %v1585, %v1629
    %v1657 = vadd.f32 %v1586, %v1631
    %v1658 = vadd.f32 %v1587, %v1633
    %v1659 = vadd.f32 %v1588, %v1635
    %v1660 = vadd.f32 %v1589, %v1637
    %v1661 = vadd.f32 %v1590, %v1639
    %v1662 = vadd.f32 %v1591, %v1641
    %v1663 = vadd.f32 %v1592, %v1643
    %v1664 = vcombine.high %v1600, %v1600
    %1665 = vrot.lane.b32.xlu0 %v1600, 32
    %v1666 = vpop.permute.xlu0 %1665
    %1667 = vrot.lane.b32.xlu0 %v1664, 32
    %v1668 = vpop.permute.xlu0 %1667
    %vm1669 = vcmask 261120
    %v1670 = vsel %vm1669, %v1666, %v1668
    %v1672 = vmul.f32 %v1562, %v1670
    %v1673 = vmul.f32 %v1563, %v1670
    %v1674 = vmul.f32 %v1564, %v1670
    %v1675 = vmul.f32 %v1565, %v1670
    %v1676 = vmul.f32 %v1566, %v1670
    %v1677 = vmul.f32 %v1567, %v1670
    %v1678 = vmul.f32 %v1568, %v1670
    %v1679 = vmul.f32 %v1569, %v1670
    %v1680 = vmul.f32 %v1570, %v1670
    %v1681 = vmul.f32 %v1571, %v1670
    %1692 = vrot.lane.b32.xlu0 %v1672, 126
    %v1693 = vpop.permute.xlu0 %1692
    %1694 = vrot.lane.b32.xlu0 %v1673, 126
    %v1695 = vpop.permute.xlu0 %1694
    %1696 = vrot.lane.b32.xlu0 %v1674, 126
    %v1697 = vpop.permute.xlu0 %1696
    %1698 = vrot.lane.b32.xlu0 %v1675, 126
    %v1699 = vpop.permute.xlu0 %1698
    %1700 = vrot.lane.b32.xlu0 %v1676, 126
    %v1701 = vpop.permute.xlu0 %1700
    %1702 = vrot.lane.b32.xlu0 %v1677, 126
    %v1703 = vpop.permute.xlu0 %1702
    %1704 = vrot.lane.b32.xlu0 %v1678, 126
    %v1705 = vpop.permute.xlu0 %1704
    %1706 = vrot.lane.b32.xlu0 %v1679, 126
    %v1707 = vpop.permute.xlu0 %1706
    %1708 = vrot.lane.b32.xlu0 %v1680, 126
    %v1709 = vpop.permute.xlu0 %1708
    %1710 = vrot.lane.b32.xlu0 %v1681, 126
    %v1711 = vpop.permute.xlu0 %1710
    %v1722 = vadd.f32 %v1654, %v1693
    %v1723 = vadd.f32 %v1655, %v1695
    %v1724 = vadd.f32 %v1656, %v1697
    %v1725 = vadd.f32 %v1657, %v1699
    %v1726 = vadd.f32 %v1658, %v1701
    %v1727 = vadd.f32 %v1659, %v1703
    %v1728 = vadd.f32 %v1660, %v1705
    %v1729 = vadd.f32 %v1661, %v1707
    %v1730 = vadd.f32 %v1662, %v1709
    %v1731 = vadd.f32 %v1663, %v1711
    %1732 = vrot.lane.b32.xlu0 %v1664, 116
    %v1733 = vpop.permute.xlu0 %1732
    %v1735 = vmul.f32 %v1562, %v1733
    %v1736 = vmul.f32 %v1563, %v1733
    %v1737 = vmul.f32 %v1564, %v1733
    %v1738 = vmul.f32 %v1565, %v1733
    %v1739 = vmul.f32 %v1566, %v1733
    %v1740 = vmul.f32 %v1567, %v1733
    %v1741 = vmul.f32 %v1568, %v1733
    %v1742 = vmul.f32 %v1569, %v1733
    %v1743 = vmul.f32 %v1570, %v1733
    %v1744 = vmul.f32 %v1571, %v1733
    %1755 = vrot.lane.b32.xlu0 %v1735, 121
    %v1756 = vpop.permute.xlu0 %1755
    %1757 = vrot.lane.b32.xlu0 %v1736, 121
    %v1758 = vpop.permute.xlu0 %1757
    %1759 = vrot.lane.b32.xlu0 %v1737, 121
    %v1760 = vpop.permute.xlu0 %1759
    %1761 = vrot.lane.b32.xlu0 %v1738, 121
    %v1762 = vpop.permute.xlu0 %1761
    %1763 = vrot.lane.b32.xlu0 %v1739, 121
    %v1764 = vpop.permute.xlu0 %1763
    %1765 = vrot.lane.b32.xlu0 %v1740, 121
    %v1766 = vpop.permute.xlu0 %1765
    %1767 = vrot.lane.b32.xlu0 %v1741, 121
    %v1768 = vpop.permute.xlu0 %1767
    %1769 = vrot.lane.b32.xlu0 %v1742, 121
    %v1770 = vpop.permute.xlu0 %1769
    %1771 = vrot.lane.b32.xlu0 %v1743, 121
    %v1772 = vpop.permute.xlu0 %1771
    %1773 = vrot.lane.b32.xlu0 %v1744, 121
    %v1774 = vpop.permute.xlu0 %1773
    %v1785 = vadd.f32 %v1722, %v1756
    %v1786 = vadd.f32 %v1723, %v1758
    %v1787 = vadd.f32 %v1724, %v1760
    %v1788 = vadd.f32 %v1725, %v1762
    %v1789 = vadd.f32 %v1726, %v1764
    %v1790 = vadd.f32 %v1727, %v1766
    %v1791 = vadd.f32 %v1728, %v1768
    %v1792 = vadd.f32 %v1729, %v1770
    %v1793 = vadd.f32 %v1730, %v1772
    %v1794 = vadd.f32 %v1731, %v1774
    %1795 = vrot.lane.b32.xlu0 %v1664, 68
    %v1796 = vpop.permute.xlu0 %1795
    %v1798 = vmul.f32 %v1562, %v1796
    %v1799 = vmul.f32 %v1563, %v1796
    %v1800 = vmul.f32 %v1564, %v1796
    %v1801 = vmul.f32 %v1565, %v1796
    %v1802 = vmul.f32 %v1566, %v1796
    %v1803 = vmul.f32 %v1567, %v1796
    %v1804 = vmul.f32 %v1568, %v1796
    %v1805 = vmul.f32 %v1569, %v1796
    %v1806 = vmul.f32 %v1570, %v1796
    %v1807 = vmul.f32 %v1571, %v1796
    %1818 = vrot.lane.b32.xlu0 %v1798, 120
    %v1819 = vpop.permute.xlu0 %1818
    %1820 = vrot.lane.b32.xlu0 %v1799, 120
    %v1821 = vpop.permute.xlu0 %1820
    %1822 = vrot.lane.b32.xlu0 %v1800, 120
    %v1823 = vpop.permute.xlu0 %1822
    %1824 = vrot.lane.b32.xlu0 %v1801, 120
    %v1825 = vpop.permute.xlu0 %1824
    %1826 = vrot.lane.b32.xlu0 %v1802, 120
    %v1827 = vpop.permute.xlu0 %1826
    %1828 = vrot.lane.b32.xlu0 %v1803, 120
    %v1829 = vpop.permute.xlu0 %1828
    %1830 = vrot.lane.b32.xlu0 %v1804, 120
    %v1831 = vpop.permute.xlu0 %1830
    %1832 = vrot.lane.b32.xlu0 %v1805, 120
    %v1833 = vpop.permute.xlu0 %1832
    %1834 = vrot.lane.b32.xlu0 %v1806, 120
    %v1835 = vpop.permute.xlu0 %1834
    %1836 = vrot.lane.b32.xlu0 %v1807, 120
    %v1837 = vpop.permute.xlu0 %1836
    %v1848 = vadd.f32 %v1785, %v1819
    %v1849 = vadd.f32 %v1786, %v1821
    %v1850 = vadd.f32 %v1787, %v1823
    %v1851 = vadd.f32 %v1788, %v1825
    %v1852 = vadd.f32 %v1789, %v1827
    %v1853 = vadd.f32 %v1790, %v1829
    %v1854 = vadd.f32 %v1791, %v1831
    %v1855 = vadd.f32 %v1792, %v1833
    %v1856 = vadd.f32 %v1793, %v1835
    %v1857 = vadd.f32 %v1794, %v1837
    %v1858 = vcombine.high %v1572, %v1572
    %v1860 = vunpack.c.l.s4 1983009808
    %v1861 = vunpack.c.0.s8 %v1860
    %v1862 = vlaneseq
    %v1863 = vshrl.u32 %v1862, 7
    %v1864 = vsub.s32 %v1861, %v1863
    %v1865 = vrot.slane %v1858, %v1864
    %1866 = vrot.lane.b32.xlu0 %v1664, 20
    %v1867 = vpop.permute.xlu0 %1866
    %1868 = vrot.lane.b32.xlu0 %v1865, 20
    %v1869 = vpop.permute.xlu0 %1868
    %vm1870 = vcmask 162816
    %v1871 = vsel %vm1870, %v1867, %v1869
    %v1873 = vmul.f32 %v1562, %v1871
    %v1874 = vmul.f32 %v1563, %v1871
    %v1875 = vmul.f32 %v1564, %v1871
    %v1876 = vmul.f32 %v1565, %v1871
    %v1877 = vmul.f32 %v1566, %v1871
    %v1878 = vmul.f32 %v1567, %v1871
    %v1879 = vmul.f32 %v1568, %v1871
    %v1880 = vmul.f32 %v1569, %v1871
    %v1881 = vmul.f32 %v1570, %v1871
    %v1882 = vmul.f32 %v1571, %v1871
    %1893 = vrot.lane.b32.xlu0 %v1873, 119
    %v1894 = vpop.permute.xlu0 %1893
    %1895 = vrot.lane.b32.xlu0 %v1874, 119
    %v1896 = vpop.permute.xlu0 %1895
    %1897 = vrot.lane.b32.xlu0 %v1875, 119
    %v1898 = vpop.permute.xlu0 %1897
    %1899 = vrot.lane.b32.xlu0 %v1876, 119
    %v1900 = vpop.permute.xlu0 %1899
    %1901 = vrot.lane.b32.xlu0 %v1877, 119
    %v1902 = vpop.permute.xlu0 %1901
    %1903 = vrot.lane.b32.xlu0 %v1878, 119
    %v1904 = vpop.permute.xlu0 %1903
    %1905 = vrot.lane.b32.xlu0 %v1879, 119
    %v1906 = vpop.permute.xlu0 %1905
    %1907 = vrot.lane.b32.xlu0 %v1880, 119
    %v1908 = vpop.permute.xlu0 %1907
    %1909 = vrot.lane.b32.xlu0 %v1881, 119
    %v1910 = vpop.permute.xlu0 %1909
    %1911 = vrot.lane.b32.xlu0 %v1882, 119
    %v1912 = vpop.permute.xlu0 %1911
    %v1923 = vadd.f32 %v1848, %v1894
    %v1924 = vadd.f32 %v1849, %v1896
    %v1925 = vadd.f32 %v1850, %v1898
    %v1926 = vadd.f32 %v1851, %v1900
    %v1927 = vadd.f32 %v1852, %v1902
    %v1928 = vadd.f32 %v1853, %v1904
    %v1929 = vadd.f32 %v1854, %v1906
    %v1930 = vadd.f32 %v1855, %v1908
    %v1931 = vadd.f32 %v1856, %v1910
    %v1932 = vadd.f32 %v1857, %v1912
    %1933 = vrot.lane.b32.xlu0 %v1865, 104
    %v1934 = vpop.permute.xlu0 %1933
    %v1936 = vmul.f32 %v1562, %v1934
    %v1937 = vmul.f32 %v1563, %v1934
    %v1938 = vmul.f32 %v1564, %v1934
    %v1939 = vmul.f32 %v1565, %v1934
    %v1940 = vmul.f32 %v1566, %v1934
    %v1941 = vmul.f32 %v1567, %v1934
    %v1942 = vmul.f32 %v1568, %v1934
    %v1943 = vmul.f32 %v1569, %v1934
    %v1944 = vmul.f32 %v1570, %v1934
    %v1945 = vmul.f32 %v1571, %v1934
    %1956 = vrot.lane.b32.xlu0 %v1936, 114
    %v1957 = vpop.permute.xlu0 %1956
    %1958 = vrot.lane.b32.xlu0 %v1937, 114
    %v1959 = vpop.permute.xlu0 %1958
    %1960 = vrot.lane.b32.xlu0 %v1938, 114
    %v1961 = vpop.permute.xlu0 %1960
    %1962 = vrot.lane.b32.xlu0 %v1939, 114
    %v1963 = vpop.permute.xlu0 %1962
    %1964 = vrot.lane.b32.xlu0 %v1940, 114
    %v1965 = vpop.permute.xlu0 %1964
    %1966 = vrot.lane.b32.xlu0 %v1941, 114
    %v1967 = vpop.permute.xlu0 %1966
    %1968 = vrot.lane.b32.xlu0 %v1942, 114
    %v1969 = vpop.permute.xlu0 %1968
    %1970 = vrot.lane.b32.xlu0 %v1943, 114
    %v1971 = vpop.permute.xlu0 %1970
    %1972 = vrot.lane.b32.xlu0 %v1944, 114
    %v1973 = vpop.permute.xlu0 %1972
    %1974 = vrot.lane.b32.xlu0 %v1945, 114
    %v1975 = vpop.permute.xlu0 %1974
    %v1986 = vadd.f32 %v1923, %v1957
    %v1987 = vadd.f32 %v1924, %v1959
    %v1988 = vadd.f32 %v1925, %v1961
    %v1989 = vadd.f32 %v1926, %v1963
    %v1990 = vadd.f32 %v1927, %v1965
    %v1991 = vadd.f32 %v1928, %v1967
    %v1992 = vadd.f32 %v1929, %v1969
    %v1993 = vadd.f32 %v1930, %v1971
    %v1994 = vadd.f32 %v1931, %v1973
    %v1995 = vadd.f32 %v1932, %v1975
    %v1996 = vcombine.high %v1865, %v1865
    %1997 = vrot.lane.b32.xlu0 %v1865, 56
    %v1998 = vpop.permute.xlu0 %1997
    %1999 = vrot.lane.b32.xlu0 %v1996, 56
    %v2000 = vpop.permute.xlu0 %1999
    %vm2001 = vcmask 457728
    %v2002 = vsel %vm2001, %v1998, %v2000
    %v2004 = vmul.f32 %v1562, %v2002
    %v2005 = vmul.f32 %v1563, %v2002
    %v2006 = vmul.f32 %v1564, %v2002
    %v2007 = vmul.f32 %v1565, %v2002
    %v2008 = vmul.f32 %v1566, %v2002
    %v2009 = vmul.f32 %v1567, %v2002
    %v2010 = vmul.f32 %v1568, %v2002
    %v2011 = vmul.f32 %v1569, %v2002
    %v2012 = vmul.f32 %v1570, %v2002
    %v2013 = vmul.f32 %v1571, %v2002
    %2024 = vrot.lane.b32.xlu0 %v2004, 113
    %v2025 = vpop.permute.xlu0 %2024
    %2026 = vrot.lane.b32.xlu0 %v2005, 113
    %v2027 = vpop.permute.xlu0 %2026
    %2028 = vrot.lane.b32.xlu0 %v2006, 113
    %v2029 = vpop.permute.xlu0 %2028
    %2030 = vrot.lane.b32.xlu0 %v2007, 113
    %v2031 = vpop.permute.xlu0 %2030
    %2032 = vrot.lane.b32.xlu0 %v2008, 113
    %v2033 = vpop.permute.xlu0 %2032
    %2034 = vrot.lane.b32.xlu0 %v2009, 113
    %v2035 = vpop.permute.xlu0 %2034
    %2036 = vrot.lane.b32.xlu0 %v2010, 113
    %v2037 = vpop.permute.xlu0 %2036
    %2038 = vrot.lane.b32.xlu0 %v2011, 113
    %v2039 = vpop.permute.xlu0 %2038
    %2040 = vrot.lane.b32.xlu0 %v2012, 113
    %v2041 = vpop.permute.xlu0 %2040
    %2042 = vrot.lane.b32.xlu0 %v2013, 113
    %v2043 = vpop.permute.xlu0 %2042
    %v2054 = vadd.f32 %v1986, %v2025
    %v2055 = vadd.f32 %v1987, %v2027
    %v2056 = vadd.f32 %v1988, %v2029
    %v2057 = vadd.f32 %v1989, %v2031
    %v2058 = vadd.f32 %v1990, %v2033
    %v2059 = vadd.f32 %v1991, %v2035
    %v2060 = vadd.f32 %v1992, %v2037
    %v2061 = vadd.f32 %v1993, %v2039
    %v2062 = vadd.f32 %v1994, %v2041
    %v2063 = vadd.f32 %v1995, %v2043
    %2064 = vrot.lane.b32.xlu0 %v1996, 8
    %v2065 = vpop.permute.xlu0 %2064
    %v2067 = vmul.f32 %v1562, %v2065
    %v2068 = vmul.f32 %v1563, %v2065
    %v2069 = vmul.f32 %v1564, %v2065
    %v2070 = vmul.f32 %v1565, %v2065
    %v2071 = vmul.f32 %v1566, %v2065
    %v2072 = vmul.f32 %v1567, %v2065
    %v2073 = vmul.f32 %v1568, %v2065
    %v2074 = vmul.f32 %v1569, %v2065
    %v2075 = vmul.f32 %v1570, %v2065
    %v2076 = vmul.f32 %v1571, %v2065
    %2087 = vrot.lane.b32.xlu0 %v2067, 112
    %v2088 = vpop.permute.xlu0 %2087
    %2089 = vrot.lane.b32.xlu0 %v2068, 112
    %v2090 = vpop.permute.xlu0 %2089
    %2091 = vrot.lane.b32.xlu0 %v2069, 112
    %v2092 = vpop.permute.xlu0 %2091
    %2093 = vrot.lane.b32.xlu0 %v2070, 112
    %v2094 = vpop.permute.xlu0 %2093
    %2095 = vrot.lane.b32.xlu0 %v2071, 112
    %v2096 = vpop.permute.xlu0 %2095
    %2097 = vrot.lane.b32.xlu0 %v2072, 112
    %v2098 = vpop.permute.xlu0 %2097
    %2099 = vrot.lane.b32.xlu0 %v2073, 112
    %v2100 = vpop.permute.xlu0 %2099
    %2101 = vrot.lane.b32.xlu0 %v2074, 112
    %v2102 = vpop.permute.xlu0 %2101
    %2103 = vrot.lane.b32.xlu0 %v2075, 112
    %v2104 = vpop.permute.xlu0 %2103
    %2105 = vrot.lane.b32.xlu0 %v2076, 112
    %v2106 = vpop.permute.xlu0 %2105
    %v2117 = vadd.f32 %v2054, %v2088
    %v2118 = vadd.f32 %v2055, %v2090
    %v2119 = vadd.f32 %v2056, %v2092
    %v2120 = vadd.f32 %v2057, %v2094
    %v2121 = vadd.f32 %v2058, %v2096
    %v2122 = vadd.f32 %v2059, %v2098
    %v2123 = vadd.f32 %v2060, %v2100
    %v2124 = vadd.f32 %v2061, %v2102
    %v2125 = vadd.f32 %v2062, %v2104
    %v2126 = vadd.f32 %v2063, %v2106
    %v2137 = vrot.slane %v2117, 1
    %v2138 = vrot.slane %v2118, 1
    %v2139 = vrot.slane %v2119, 1
    %v2140 = vrot.slane %v2120, 1
    %v2141 = vrot.slane %v2121, 1
    %v2142 = vrot.slane %v2122, 1
    %v2143 = vrot.slane %v2123, 1
    %v2144 = vrot.slane %v2124, 1
    %v2145 = vrot.slane %v2125, 1
    %v2146 = vrot.slane %v2126, 1
    %v2157 = vadd.f32 %v2117, %v2137
    %v2158 = vadd.f32 %v2118, %v2138
    %v2159 = vadd.f32 %v2119, %v2139
    %v2160 = vadd.f32 %v2120, %v2140
    %v2161 = vadd.f32 %v2121, %v2141
    %v2162 = vadd.f32 %v2122, %v2142
    %v2163 = vadd.f32 %v2123, %v2143
    %v2164 = vadd.f32 %v2124, %v2144
    %v2165 = vadd.f32 %v2125, %v2145
    %v2166 = vadd.f32 %v2126, %v2146
    %v2167 = vxor.u32 %v2157, 2147483648
    %v2168 = vxor.u32 %v2158, 2147483648
    %v2169 = vxor.u32 %v2159, 2147483648
    %v2170 = vxor.u32 %v2160, 2147483648
    %v2171 = vxor.u32 %v2161, 2147483648
    %v2172 = vxor.u32 %v2162, 2147483648
    %v2173 = vxor.u32 %v2163, 2147483648
    %v2174 = vxor.u32 %v2164, 2147483648
    %v2175 = vxor.u32 %v2165, 2147483648
    %v2176 = vxor.u32 %v2166, 2147483648
    %v2177 = vmul.f32 %v2167, 1.442695
    %v2178 = vpow.pop %v2177
    %v2179 = vmul.f32 %v2168, 1.442695
    %v2180 = vpow.pop %v2179
    %v2181 = vmul.f32 %v2169, 1.442695
    %v2182 = vpow.pop %v2181
    %v2183 = vmul.f32 %v2170, 1.442695
    %v2184 = vpow.pop %v2183
    %v2185 = vmul.f32 %v2171, 1.442695
    %v2186 = vpow.pop %v2185
    %v2187 = vmul.f32 %v2172, 1.442695
    %v2188 = vpow.pop %v2187
    %v2189 = vmul.f32 %v2173, 1.442695
    %v2190 = vpow.pop %v2189
    %v2191 = vmul.f32 %v2174, 1.442695
    %v2192 = vpow.pop %v2191
    %v2193 = vmul.f32 %v2175, 1.442695
    %v2194 = vpow.pop %v2193
    %v2195 = vmul.f32 %v2176, 1.442695
    %v2196 = vpow.pop %v2195
    %v2197 = vadd.f32 %v2178, 1.0
    %v2198 = vadd.f32 %v2180, 1.0
    %v2199 = vadd.f32 %v2182, 1.0
    %v2200 = vadd.f32 %v2184, 1.0
    %v2201 = vadd.f32 %v2186, 1.0
    %v2202 = vadd.f32 %v2188, 1.0
    %v2203 = vadd.f32 %v2190, 1.0
    %v2204 = vadd.f32 %v2192, 1.0
    %v2205 = vadd.f32 %v2194, 1.0
    %v2206 = vadd.f32 %v2196, 1.0
    %v2207 = vrcp.pop %v2197
    %v2208 = vmul.f32 1.0, %v2207
    %v2209 = vrcp.pop %v2198
    %v2210 = vmul.f32 1.0, %v2209
    %v2211 = vrcp.pop %v2199
    %v2212 = vmul.f32 1.0, %v2211
    %v2213 = vrcp.pop %v2200
    %v2214 = vmul.f32 1.0, %v2213
    %v2215 = vrcp.pop %v2201
    %v2216 = vmul.f32 1.0, %v2215
    %v2217 = vrcp.pop %v2202
    %v2218 = vmul.f32 1.0, %v2217
    %v2219 = vrcp.pop %v2203
    %v2220 = vmul.f32 1.0, %v2219
    %v2221 = vrcp.pop %v2204
    %v2222 = vmul.f32 1.0, %v2221
    %v2223 = vrcp.pop %v2205
    %v2224 = vmul.f32 1.0, %v2223
    %v2225 = vrcp.pop %v2206
    %v2226 = vmul.f32 1.0, %v2225
    %2228 = vset.pattern.permute.xlu0 0
    %2229 = vperm.xlu0 %2228, %v1480
    %v2230 = vpop.permute.xlu0 %2229
    %2233 = vset.pattern.permute.xlu0 0
    %2234 = vperm.xlu0 %2233, %v1482
    %v2235 = vpop.permute.xlu0 %2234
    %2238 = vset.pattern.permute.xlu0 0
    %2239 = vperm.xlu0 %2238, %v1484
    %v2240 = vpop.permute.xlu0 %2239
    %2243 = vset.pattern.permute.xlu0 0
    %2244 = vperm.xlu0 %2243, %v1486
    %v2245 = vpop.permute.xlu0 %2244
    %2248 = vset.pattern.permute.xlu0 0
    %2249 = vperm.xlu0 %2248, %v1488
    %v2250 = vpop.permute.xlu0 %2249
    %2253 = vset.pattern.permute.xlu0 0
    %2254 = vperm.xlu0 %2253, %v1490
    %v2255 = vpop.permute.xlu0 %2254
    %2258 = vset.pattern.permute.xlu0 0
    %2259 = vperm.xlu0 %2258, %v1492
    %v2260 = vpop.permute.xlu0 %2259
    %2263 = vset.pattern.permute.xlu0 0
    %2264 = vperm.xlu0 %2263, %v1494
    %v2265 = vpop.permute.xlu0 %2264
    %2268 = vset.pattern.permute.xlu0 0
    %2269 = vperm.xlu0 %2268, %v1496
    %v2270 = vpop.permute.xlu0 %2269
    %2273 = vset.pattern.permute.xlu0 0
    %2274 = vperm.xlu0 %2273, %v1498
    %v2275 = vpop.permute.xlu0 %2274
    %v2277 = vmul.f32 %v2208, %v2230
    %v2278 = vmul.f32 %v2210, %v2235
    %v2279 = vmul.f32 %v2212, %v2240
    %v2280 = vmul.f32 %v2214, %v2245
    %v2281 = vmul.f32 %v2216, %v2250
    %v2282 = vmul.f32 %v2218, %v2255
    %v2283 = vmul.f32 %v2220, %v2260
    %v2284 = vmul.f32 %v2222, %v2265
    %v2285 = vmul.f32 %v2224, %v2270
    %v2286 = vmul.f32 %v2226, %v2275
    %v2287 = vlaneseq
    %v2288 = vshrl.u32 %v2287, 7
    %v2289 = vsub.s32 0, %v2288
    %v2290 = vrot.slane %v2277, %v2289
    %v2291 = vlaneseq
    %v2292 = vshrl.u32 %v2291, 7
    %v2293 = vsub.s32 0, %v2292
    %v2294 = vrot.slane %v2278, %v2293
    %v2295 = vlaneseq
    %v2296 = vshrl.u32 %v2295, 7
    %v2297 = vsub.s32 0, %v2296
    %v2298 = vrot.slane %v2279, %v2297
    %v2299 = vlaneseq
    %v2300 = vshrl.u32 %v2299, 7
    %v2301 = vsub.s32 0, %v2300
    %v2302 = vrot.slane %v2280, %v2301
    %v2303 = vlaneseq
    %v2304 = vshrl.u32 %v2303, 7
    %v2305 = vsub.s32 0, %v2304
    %v2306 = vrot.slane %v2281, %v2305
    %v2307 = vlaneseq
    %v2308 = vshrl.u32 %v2307, 7
    %v2309 = vsub.s32 0, %v2308
    %v2310 = vrot.slane %v2282, %v2309
    %v2311 = vlaneseq
    %v2312 = vshrl.u32 %v2311, 7
    %v2313 = vsub.s32 0, %v2312
    %v2314 = vrot.slane %v2283, %v2313
    %v2315 = vlaneseq
    %v2316 = vshrl.u32 %v2315, 7
    %v2317 = vsub.s32 0, %v2316
    %v2318 = vrot.slane %v2284, %v2317
    %v2319 = vlaneseq
    %v2320 = vshrl.u32 %v2319, 7
    %v2321 = vsub.s32 0, %v2320
    %v2322 = vrot.slane %v2285, %v2321
    %v2323 = vlaneseq
    %v2324 = vshrl.u32 %v2323, 7
    %v2325 = vsub.s32 0, %v2324
    %v2326 = vrot.slane %v2286, %v2325
    %v2327 = vmul.f32 %v2290, %v43
    %v2328 = vmul.f32 %v2290, %v44
    %v2329 = vmul.f32 %v2290, %v45
    %v2330 = vmul.f32 %v2290, %v46
    %v2331 = vmul.f32 %v2294, %v47
    %v2332 = vmul.f32 %v2294, %v48
    %v2333 = vmul.f32 %v2294, %v49
    %v2334 = vmul.f32 %v2294, %v50
    %v2335 = vmul.f32 %v2298, %v51
    %v2336 = vmul.f32 %v2298, %v52
    %v2337 = vmul.f32 %v2298, %v53
    %v2338 = vmul.f32 %v2298, %v54
    %v2339 = vmul.f32 %v2302, %v55
    %v2340 = vmul.f32 %v2302, %v56
    %v2341 = vmul.f32 %v2302, %v57
    %v2342 = vmul.f32 %v2302, %v58
    %v2343 = vmul.f32 %v2306, %v59
    %v2344 = vmul.f32 %v2306, %v60
    %v2345 = vmul.f32 %v2306, %v61
    %v2346 = vmul.f32 %v2306, %v62
    %v2347 = vmul.f32 %v2310, %v63
    %v2348 = vmul.f32 %v2310, %v64
    %v2349 = vmul.f32 %v2310, %v65
    %v2350 = vmul.f32 %v2310, %v66
    %v2351 = vmul.f32 %v2314, %v67
    %v2352 = vmul.f32 %v2314, %v68
    %v2353 = vmul.f32 %v2314, %v69
    %v2354 = vmul.f32 %v2314, %v70
    %v2355 = vmul.f32 %v2318, %v71
    %v2356 = vmul.f32 %v2318, %v72
    %v2357 = vmul.f32 %v2318, %v73
    %v2358 = vmul.f32 %v2318, %v74
    %v2359 = vmul.f32 %v2322, %v75
    %v2360 = vmul.f32 %v2322, %v76
    %v2361 = vmul.f32 %v2322, %v77
    %v2362 = vmul.f32 %v2322, %v78
    %v2363 = vmul.f32 %v2326, %v79
    %v2364 = vmul.f32 %v2326, %v80
    %v2365 = vmul.f32 %v2326, %v81
    %v2366 = vmul.f32 %v2326, %v82
    %v2367 = vmul.f32 %v2327, %v1065
    %v2368 = vmul.f32 %v2328, %v1067
    %v2369 = vmul.f32 %v2329, %v1069
    %v2370 = vmul.f32 %v2330, %v1071
    %v2371 = vmul.f32 %v2331, %v1073
    %v2372 = vmul.f32 %v2332, %v1075
    %v2373 = vmul.f32 %v2333, %v1077
    %v2374 = vmul.f32 %v2334, %v1079
    %v2375 = vmul.f32 %v2335, %v1081
    %v2376 = vmul.f32 %v2336, %v1083
    %v2377 = vmul.f32 %v2337, %v1085
    %v2378 = vmul.f32 %v2338, %v1087
    %v2379 = vmul.f32 %v2339, %v1089
    %v2380 = vmul.f32 %v2340, %v1091
    %v2381 = vmul.f32 %v2341, %v1093
    %v2382 = vmul.f32 %v2342, %v1095
    %v2383 = vmul.f32 %v2343, %v1097
    %v2384 = vmul.f32 %v2344, %v1099
    %v2385 = vmul.f32 %v2345, %v1101
    %v2386 = vmul.f32 %v2346, %v1103
    %v2387 = vmul.f32 %v2347, %v1105
    %v2388 = vmul.f32 %v2348, %v1107
    %v2389 = vmul.f32 %v2349, %v1109
    %v2390 = vmul.f32 %v2350, %v1111
    %v2391 = vmul.f32 %v2351, %v1113
    %v2392 = vmul.f32 %v2352, %v1115
    %v2393 = vmul.f32 %v2353, %v1117
    %v2394 = vmul.f32 %v2354, %v1119
    %v2395 = vmul.f32 %v2355, %v1121
    %v2396 = vmul.f32 %v2356, %v1123
    %v2397 = vmul.f32 %v2357, %v1125
    %v2398 = vmul.f32 %v2358, %v1127
    %v2399 = vmul.f32 %v2359, %v1129
    %v2400 = vmul.f32 %v2360, %v1131
    %v2401 = vmul.f32 %v2361, %v1133
    %v2402 = vmul.f32 %v2362, %v1135
    %v2403 = vmul.f32 %v2363, %v1137
    %v2404 = vmul.f32 %v2364, %v1139
    %v2405 = vmul.f32 %v2365, %v1141
    %v2406 = vmul.f32 %v2366, %v1143
    %v2407 = vadd.f32 %v2367, %v43
    %v2408 = vadd.f32 %v2368, %v44
    %v2409 = vadd.f32 %v2369, %v45
    %v2410 = vadd.f32 %v2370, %v46
    %v2411 = vadd.f32 %v2371, %v47
    %v2412 = vadd.f32 %v2372, %v48
    %v2413 = vadd.f32 %v2373, %v49
    %v2414 = vadd.f32 %v2374, %v50
    %v2415 = vadd.f32 %v2375, %v51
    %v2416 = vadd.f32 %v2376, %v52
    %v2417 = vadd.f32 %v2377, %v53
    %v2418 = vadd.f32 %v2378, %v54
    %v2419 = vadd.f32 %v2379, %v55
    %v2420 = vadd.f32 %v2380, %v56
    %v2421 = vadd.f32 %v2381, %v57
    %v2422 = vadd.f32 %v2382, %v58
    %v2423 = vadd.f32 %v2383, %v59
    %v2424 = vadd.f32 %v2384, %v60
    %v2425 = vadd.f32 %v2385, %v61
    %v2426 = vadd.f32 %v2386, %v62
    %v2427 = vadd.f32 %v2387, %v63
    %v2428 = vadd.f32 %v2388, %v64
    %v2429 = vadd.f32 %v2389, %v65
    %v2430 = vadd.f32 %v2390, %v66
    %v2431 = vadd.f32 %v2391, %v67
    %v2432 = vadd.f32 %v2392, %v68
    %v2433 = vadd.f32 %v2393, %v69
    %v2434 = vadd.f32 %v2394, %v70
    %v2435 = vadd.f32 %v2395, %v71
    %v2436 = vadd.f32 %v2396, %v72
    %v2437 = vadd.f32 %v2397, %v73
    %v2438 = vadd.f32 %v2398, %v74
    %v2439 = vadd.f32 %v2399, %v75
    %v2440 = vadd.f32 %v2400, %v76
    %v2441 = vadd.f32 %v2401, %v77
    %v2442 = vadd.f32 %v2402, %v78
    %v2443 = vadd.f32 %v2403, %v79
    %v2444 = vadd.f32 %v2404, %v80
    %v2445 = vadd.f32 %v2405, %v81
    %v2446 = vadd.f32 %v2406, %v82
    %v2447 = vmax.f32 %v2407, 0.0
    %v2448 = vmax.f32 %v2408, 0.0
    %v2449 = vmax.f32 %v2409, 0.0
    %v2450 = vmax.f32 %v2410, 0.0
    %v2451 = vmax.f32 %v2411, 0.0
    %v2452 = vmax.f32 %v2412, 0.0
    %v2453 = vmax.f32 %v2413, 0.0
    %v2454 = vmax.f32 %v2414, 0.0
    %v2455 = vmax.f32 %v2415, 0.0
    %v2456 = vmax.f32 %v2416, 0.0
    %v2457 = vmax.f32 %v2417, 0.0
    %v2458 = vmax.f32 %v2418, 0.0
    %v2459 = vmax.f32 %v2419, 0.0
    %v2460 = vmax.f32 %v2420, 0.0
    %v2461 = vmax.f32 %v2421, 0.0
    %v2462 = vmax.f32 %v2422, 0.0
    %v2463 = vmax.f32 %v2423, 0.0
    %v2464 = vmax.f32 %v2424, 0.0
    %v2465 = vmax.f32 %v2425, 0.0
    %v2466 = vmax.f32 %v2426, 0.0
    %v2467 = vmax.f32 %v2427, 0.0
    %v2468 = vmax.f32 %v2428, 0.0
    %v2469 = vmax.f32 %v2429, 0.0
    %v2470 = vmax.f32 %v2430, 0.0
    %v2471 = vmax.f32 %v2431, 0.0
    %v2472 = vmax.f32 %v2432, 0.0
    %v2473 = vmax.f32 %v2433, 0.0
    %v2474 = vmax.f32 %v2434, 0.0
    %v2475 = vmax.f32 %v2435, 0.0
    %v2476 = vmax.f32 %v2436, 0.0
    %v2477 = vmax.f32 %v2437, 0.0
    %v2478 = vmax.f32 %v2438, 0.0
    %v2479 = vmax.f32 %v2439, 0.0
    %v2480 = vmax.f32 %v2440, 0.0
    %v2481 = vmax.f32 %v2441, 0.0
    %v2482 = vmax.f32 %v2442, 0.0
    %v2483 = vmax.f32 %v2443, 0.0
    %v2484 = vmax.f32 %v2444, 0.0
    %v2485 = vmax.f32 %v2445, 0.0
    %v2486 = vmax.f32 %v2446, 0.0
    %2487 = vst.msk [vmem:[#allocation6] sm:$0xff] %vm83, %v2447
    %2488 = vst.msk [vmem:[#allocation6 + $0x8] sm:$0xff] %vm83, %v2448
    %2489 = vst.msk [vmem:[#allocation6 + $0x10] sm:$0xff] %vm83, %v2449
    %2490 = vst.msk [vmem:[#allocation6 + $0x18] sm:$0xff] %vm83, %v2450
    %2491 = vst.msk [vmem:[#allocation6 + $0x20] sm:$0xff] %vm83, %v2451
    %2492 = vst.msk [vmem:[#allocation6 + $0x28] sm:$0xff] %vm83, %v2452
    %2493 = vst.msk [vmem:[#allocation6 + $0x30] sm:$0xff] %vm83, %v2453
    %2494 = vst.msk [vmem:[#allocation6 + $0x38] sm:$0xff] %vm83, %v2454
    %2495 = vst.msk [vmem:[#allocation6 + $0x40] sm:$0xff] %vm83, %v2455
    %2496 = vst.msk [vmem:[#allocation6 + $0x48] sm:$0xff] %vm83, %v2456
    %2497 = vst.msk [vmem:[#allocation6 + $0x50] sm:$0xff] %vm83, %v2457
    %2498 = vst.msk [vmem:[#allocation6 + $0x58] sm:$0xff] %vm83, %v2458
    %2499 = vst.msk [vmem:[#allocation6 + $0x60] sm:$0xff] %vm83, %v2459
    %2500 = vst.msk [vmem:[#allocation6 + $0x68] sm:$0xff] %vm83, %v2460
    %2501 = vst.msk [vmem:[#allocation6 + $0x70] sm:$0xff] %vm83, %v2461
    %2502 = vst.msk [vmem:[#allocation6 + $0x78] sm:$0xff] %vm83, %v2462
    %2503 = vst.msk [vmem:[#allocation6 + $0x80] sm:$0xff] %vm83, %v2463
    %2504 = vst.msk [vmem:[#allocation6 + $0x88] sm:$0xff] %vm83, %v2464
    %2505 = vst.msk [vmem:[#allocation6 + $0x90] sm:$0xff] %vm83, %v2465
    %2506 = vst.msk [vmem:[#allocation6 + $0x98] sm:$0xff] %vm83, %v2466
    %2507 = vst.msk [vmem:[#allocation6 + $0xa0] sm:$0xff] %vm83, %v2467
    %2508 = vst.msk [vmem:[#allocation6 + $0xa8] sm:$0xff] %vm83, %v2468
    %2509 = vst.msk [vmem:[#allocation6 + $0xb0] sm:$0xff] %vm83, %v2469
    %2510 = vst.msk [vmem:[#allocation6 + $0xb8] sm:$0xff] %vm83, %v2470
    %2511 = vst.msk [vmem:[#allocation6 + $0xc0] sm:$0xff] %vm83, %v2471
    %2512 = vst.msk [vmem:[#allocation6 + $0xc8] sm:$0xff] %vm83, %v2472
    %2513 = vst.msk [vmem:[#allocation6 + $0xd0] sm:$0xff] %vm83, %v2473
    %2514 = vst.msk [vmem:[#allocation6 + $0xd8] sm:$0xff] %vm83, %v2474
    %2515 = vst.msk [vmem:[#allocation6 + $0xe0] sm:$0xff] %vm83, %v2475
    %2516 = vst.msk [vmem:[#allocation6 + $0xe8] sm:$0xff] %vm83, %v2476
    %2517 = vst.msk [vmem:[#allocation6 + $0xf0] sm:$0xff] %vm83, %v2477
    %2518 = vst.msk [vmem:[#allocation6 + $0xf8] sm:$0xff] %vm83, %v2478
    %2519 = vst.msk [vmem:[#allocation6 + $0x100] sm:$0xff] %vm83, %v2479
    %2520 = vst.msk [vmem:[#allocation6 + $0x108] sm:$0xff] %vm83, %v2480
    %2521 = vst.msk [vmem:[#allocation6 + $0x110] sm:$0xff] %vm83, %v2481
    %2522 = vst.msk [vmem:[#allocation6 + $0x118] sm:$0xff] %vm83, %v2482
    %2523 = vst.msk [vmem:[#allocation6 + $0x120] sm:$0xff] %vm83, %v2483
    %2524 = vst.msk [vmem:[#allocation6 + $0x128] sm:$0xff] %vm83, %v2484
    %2525 = vst.msk [vmem:[#allocation6 + $0x130] sm:$0xff] %vm83, %v2485
    %2526 = vst.msk [vmem:[#allocation6 + $0x138] sm:$0xff] %vm83, %v2486
    // Predicated region
    $region34: #{tpu_custom_call.1} parent=1 // pred_check
      _
    $region35: #{tpu_custom_call.1} parent=1 // pred_check_branch
      %2528 = sbr.rel (0) target = $region37
    $region36: #{tpu_custom_call.1} parent=1 // pred_region
      %s2530 = ssub.s32 5120, 5120
      %2531 = vsyncadd [#allocation5], %s2530
      %s2532 = sshll.u32 [#allocation6], 4
      %s2533 = int_to_ptr.vmem [resolvable:$true] %s2532
      %2538 = dma.vmem_to_hbm [thread:$0]  %s2533, 5120, %s7, [#allocation5], 128, 128, 8
    $region37: #{tpu_custom_call.1} parent=1 // pred_fallthru
      _
    // Predicated region
    $region38: #{tpu_custom_call.1} parent=1 // pred_check
      _
    $region39: #{tpu_custom_call.1} parent=1 // pred_check_branch
      %2540 = sbr.rel (0) target = $region41
    $region40: #{tpu_custom_call.1} parent=1 // pred_region
      %2541 = dma.done [#allocation5], 5120
    $region41: #{tpu_custom_call.1} parent=1 // pred_fallthru
      _
    %2542 = vsyncpa [#allocation4], 1
    %2543 = vsyncpa [#allocation5], 1

</llo_original>
